<compile_context>
chip_gen: v7x
topology: tpu7x:2x2x1
jax: 0.10.0
libtpu: 0.0.40
codegen_flags: <defaults>
</compile_context>

<pallas_src>
import math

import jax
import jax.numpy as jnp
import numpy as np
from jax import lax
from jax.experimental import pallas as pl
from jax.experimental.pallas import tpu as pltpu

N_HEAD = 4
EPS = 1e-5


def _new_gelu(x):
    return 0.5 * x * (1.0 + jnp.tanh(math.sqrt(2.0 / math.pi) * (x + 0.044715 * x ** 3)))


def _layernorm(v, a, b):
    # Matches the PyTorch module: unbiased std (N-1), divide by (std + eps).
    mean = jnp.mean(v, axis=-1, keepdims=True)
    var = jnp.sum((v - mean) ** 2, axis=-1, keepdims=True) * (1.0 / (v.shape[-1] - 1))
    inv = pl.reciprocal(jnp.sqrt(var) + EPS, approx=False)   # (rows,1): tiny, keep exact
    return a * (v - mean) * inv + b


def block_kernel(x_ref, ln1a_ref, ln1b_ref,
                 wqkv_ref, bqkv_ref, wo_ref, bo_ref,
                 ln2a_ref, ln2b_ref, w1_ref, b1_ref, w2_ref, b2_ref,
                 hid_ref, attn_ref, wei_ref):
    BB, T, C = x_ref.shape
    H = N_HEAD
    D = C // H
    G = BB * H
    M = BB * T
    bf16 = jnp.bfloat16

    # Flatten batch into the matmul M dimension (merges leading dims only).
    x = x_ref[...].reshape(M, C)                      # (M, C) f32

    # ---- ln_1 ----
    h = _layernorm(x, ln1a_ref[...], ln1b_ref[...])

    # ---- fused QKV projection: one (M,C)x(C,3C) MXU matmul, bf16 in / f32 acc ----
    # (1/sqrt(d_k) is already folded into the q columns of wqkv / bqkv.)
    qkv = jnp.dot(h.astype(bf16), wqkv_ref[...],
                  preferred_element_type=jnp.float32) + bqkv_ref[...]

    # (M, C) -> (G, T, D) head-major views via reshape/transpose (a handful of
    # relayouts per grid step instead of O(B*H) slice/stack/concat copies).
    def to_heads(m2):
        return (m2.astype(bf16).reshape(BB, T, H, D)
                  .transpose(0, 2, 1, 3).reshape(G, T, D))

    qh = to_heads(qkv[:, :C])
    kh = to_heads(qkv[:, C:2 * C])
    vh = to_heads(qkv[:, 2 * C:])

    # ---- causal attention: one batched MXU contraction over all (batch, head) ----
    rows = lax.broadcasted_iota(jnp.int32, (T, T), 0)
    cols = lax.broadcasted_iota(jnp.int32, (T, T), 1)
    causal = rows >= cols                                           # (T, T) bool

    att = jnp.einsum("gqd,gkd->gqk", qh, kh,
                     preferred_element_type=jnp.float32)            # (G, T, T) f32
    att = jnp.where(causal, att, jnp.float32(-1e30))                # select, no bias add
    att = att - jnp.max(att, axis=-1, keepdims=True)
    e = jnp.exp(att)
    inv = pl.reciprocal(jnp.sum(e, axis=-1, keepdims=True), approx=True)   # EUP vrcp
    # Single normalize+cast pass: the stored weights and the P@V operand share it.
    p = (e * inv).astype(wei_ref.dtype)
    wei_ref[...] = p.reshape(BB, H, T, T)
    # TODO(synk): for large T, KV-tile this with an online softmax (flash) so the
    # (G, T, T) slab is never materialized whole.

    z = jnp.einsum("gqk,gkd->gqd", p.astype(bf16), vh,
                   preferred_element_type=jnp.float32)              # (G, T, D)
    # regroup heads back to (M, C): rows = (b, t), cols = (h, d)
    z = z.reshape(BB, H, T, D).transpose(0, 2, 1, 3).reshape(M, C)

    # ---- attention output projection + first residual ----
    attn_out = jnp.dot(z.astype(bf16), wo_ref[...],
                       preferred_element_type=jnp.float32) + bo_ref[...]
    attn_ref[...] = attn_out.reshape(BB, T, C)
    hid1 = x + attn_out

    # ---- ln_2 + MLP (new_gelu) + second residual ----
    h2 = _layernorm(hid1, ln2a_ref[...], ln2b_ref[...])
    ff = jnp.dot(h2.astype(bf16), w1_ref[...],
                 preferred_element_type=jnp.float32) + b1_ref[...]
    ff = _new_gelu(ff)
    # TODO(synk): on v6e/v7x the gelu/exp elementwise chains could run in bf16
    # (bf16-native VPU/EUP); kept in f32 so the same kernel stays correct on v5e.
    ff = jnp.dot(ff.astype(bf16), w2_ref[...],
                 preferred_element_type=jnp.float32) + b2_ref[...]
    hid_ref[...] = (hid1 + ff).reshape(BB, T, C)


def _vmem_budget_bytes():
    # Generation-aware budget: ~3/4 of physical VMEM per TensorCore
    # (v5e/v6e: 128 MiB -> 96 MiB, v7x: 64 MiB -> 48 MiB). Fallback 48 MiB.
    try:
        cap = int(pltpu.get_tpu_info().vmem_capacity_bytes)
    except Exception:
        cap = 64 * 1024 * 1024
    return (cap * 3) // 4


def _pick_bb(B, T, C, wei_bytes, vmem_budget):
    """Batch rows per grid step.

    Targets M = BB*T ~ 256 (256-wide MXU on v6e/v7x; v5e just takes two passes),
    keeps >= 2 grid steps when B >= 2 so the 'parallel' grid axis has work for both
    v7x TensorCores, and shrinks BB until the VMEM footprint (dominated by the f32
    score slab and the double-buffered attention-weights output block) fits.
    """
    H = N_HEAD

    def footprint(bb):
        m = bb * T
        weights = 2 * (12 * C * C * 2 + 13 * C * 4)     # dbl-buffered bf16 weights + f32 biases
        act = 2 * 3 * bb * T * C * 4                    # dbl-buffered x / attn / hid blocks
        qkv = m * 3 * C * 6                             # f32 qkv + bf16 head views
        scores = 2 * bb * H * T * T * 4                 # f32 scores / exp temps
        wei = 2 * bb * H * T * T * wei_bytes            # dbl-buffered wei output block
        mlp = m * 4 * C * 6                             # f32 + bf16 MLP hidden
        return weights + act + qkv + scores + wei + mlp

    bb = max(1, min(B, (256 + T - 1) // T))
    while bb > 1 and (B % bb != 0 or B // bb < 2 or footprint(bb) > vmem_budget):
        bb -= 1
    return bb


def block_forward(x, params, batch_block=None, wei_dtype=jnp.bfloat16):
    B, T, C = x.shape
    H = N_HEAD
    D = C // H
    vmem_budget = _vmem_budget_bytes()
    wei_bytes = np.dtype(wei_dtype).itemsize
    BB = batch_block if batch_block is not None else _pick_bb(B, T, C, wei_bytes, vmem_budget)
    assert B % BB == 0

    bf16 = jnp.bfloat16
    scale = 1.0 / math.sqrt(D)
    # Fused QKV weight (C, 3C) / bias, bf16 MXU weights; 1/sqrt(d_k) folded into the
    # q columns so the kernel never runs an extra (M,C) multiply on the activations.
    wqkv = jnp.concatenate(
        [params["wq"] * scale, params["wk"], params["wv"]], axis=1).astype(bf16)
    bqkv = jnp.concatenate([params["bq"] * scale, params["bk"], params["bv"]], axis=1)
    plist = [
        params["ln1_a"], params["ln1_b"],
        wqkv, bqkv,
        params["wo"].astype(bf16), params["bo"],
        params["ln2_a"], params["ln2_b"],
        params["w1"].astype(bf16), params["b1"],
        params["w2"].astype(bf16), params["b2"],
    ]

    in_specs = [pl.BlockSpec((BB, T, C), lambda i: (i, 0, 0))]
    for p in plist:
        # Parameters: whole array resident in VMEM, same block every grid step.
        # TODO(synk): at large C mark these pipeline_mode=pl.Buffered(1) so the
        # constant-index weight blocks are not double-buffered (VMEM saving on v7x).
        in_specs.append(pl.BlockSpec(p.shape, lambda i, n=p.ndim: (0,) * n))

    out_specs = (
        pl.BlockSpec((BB, T, C), lambda i: (i, 0, 0)),
        pl.BlockSpec((BB, T, C), lambda i: (i, 0, 0)),
        pl.BlockSpec((BB, H, T, T), lambda i: (i, 0, 0, 0)),
    )
    out_shape = (
        jax.ShapeDtypeStruct((B, T, C), jnp.float32),
        jax.ShapeDtypeStruct((B, T, C), jnp.float32),
        # Attention weights in bf16 by default (halves HBM writeback + VMEM output
        # block); pass wei_dtype=jnp.float32 for full-precision parity.
        jax.ShapeDtypeStruct((B, H, T, T), wei_dtype),
    )
    return pl.pallas_call(
        block_kernel,
        grid=(B // BB,),
        in_specs=in_specs,
        out_specs=out_specs,
        out_shape=out_shape,
        compiler_params=pltpu.CompilerParams(
            dimension_semantics=("parallel",),
            vmem_limit_bytes=int(vmem_budget),
        ),
    )(x, *plist)


def block_reference(x, params):
    """Pure-JAX reference mirroring the PyTorch forward (dropout=0)."""
    B, T, C = x.shape
    H, D = N_HEAD, C // N_HEAD

    def ln(v, a, b):
        mean = v.mean(-1, keepdims=True)
        var = ((v - mean) ** 2).sum(-1, keepdims=True) / (v.shape[-1] - 1)
        return a * (v - mean) / (jnp.sqrt(var) + EPS) + b

    h = ln(x, params["ln1_a"], params["ln1_b"])
    q = h @ params["wq"] + params["bq"]
    k = h @ params["wk"] + params["bk"]
    v = h @ params["wv"] + params["bv"]
    qh = q.reshape(B, T, H, D).transpose(0, 2, 1, 3)
    kh = k.reshape(B, T, H, D).transpose(0, 2, 1, 3)
    vh = v.reshape(B, T, H, D).transpose(0, 2, 1, 3)
    att = (qh @ kh.transpose(0, 1, 3, 2)) / math.sqrt(D)
    mask = jnp.tril(jnp.ones((T, T)))
    att = jnp.where(mask == 0, -jnp.inf, att)
    att = jax.nn.softmax(att, axis=-1)
    z = (att @ vh).transpose(0, 2, 1, 3).reshape(B, T, C)
    attn_out = z @ params["wo"] + params["bo"]
    hid1 = x + attn_out
    h2 = ln(hid1, params["ln2_a"], params["ln2_b"])
    ff = _new_gelu(h2 @ params["w1"] + params["b1"])
    ff = ff @ params["w2"] + params["b2"]
    return hid1 + ff, attn_out, att


def make_params(key, C):
    ks = jax.random.split(key, 16)
    n = lambda k, shape, s: (jax.random.normal(k, shape, jnp.float32) * s)
    return {
        "ln1_a": 1.0 + n(ks[0], (1, C), 0.1),
        "ln1_b": n(ks[1], (1, C), 0.1),
        "wq": n(ks[2], (C, C), 0.05), "bq": n(ks[3], (1, C), 0.02),
        "wk": n(ks[4], (C, C), 0.05), "bk": n(ks[5], (1, C), 0.02),
        "wv": n(ks[6], (C, C), 0.05), "bv": n(ks[7], (1, C), 0.02),
        "wo": n(ks[8], (C, C), 0.05), "bo": n(ks[9], (1, C), 0.02),
        "ln2_a": 1.0 + n(ks[10], (1, C), 0.1),
        "ln2_b": n(ks[11], (1, C), 0.1),
        "w1": n(ks[12], (C, 4 * C), 0.05), "b1": n(ks[13], (1, 4 * C), 0.02),
        "w2": n(ks[14], (4 * C, C), 0.05), "b2": n(ks[15], (1, C), 0.02),
    }


if __name__ == "__main__":
    B, T, C = 2, 8, 32        # batch, seq, n_embd ; n_head = 4, d_k = 8
    key = jax.random.PRNGKey(0)
    kx, kp = jax.random.split(key)
    x = jax.random.normal(kx, (B, T, C), jnp.float32)
    params = make_params(kp, C)

    hid, attn_out, att_wei = jax.block_until_ready(block_forward(x, params))

    with jax.default_matmul_precision("highest"):
        ref_hid, ref_attn, ref_wei = block_reference(x, params)
    # bf16 MXU operands / bf16 wei output in the kernel -> loosened tolerances.
    np.testing.assert_allclose(np.asarray(hid), np.asarray(ref_hid), rtol=2e-2, atol=2e-2)
    np.testing.assert_allclose(np.asarray(attn_out), np.asarray(ref_attn), rtol=2e-2, atol=2e-2)
    np.testing.assert_allclose(np.asarray(att_wei.astype(jnp.float32)),
                               np.asarray(ref_wei), rtol=2e-2, atol=2e-2)

    print("KERNEL_OK")
</pallas_src>

<mosaic_0001>
module attributes {stable_mosaic.version = 11 : i64} {
  func.func @block_kernel(%arg0: i32, %arg1: memref<1x8x32xf32, #tpu.memory_space<vmem>>, %arg2: memref<1x32xf32, #tpu.memory_space<vmem>>, %arg3: memref<1x32xf32, #tpu.memory_space<vmem>>, %arg4: memref<32x96xbf16, #tpu.memory_space<vmem>>, %arg5: memref<1x96xf32, #tpu.memory_space<vmem>>, %arg6: memref<32x32xbf16, #tpu.memory_space<vmem>>, %arg7: memref<1x32xf32, #tpu.memory_space<vmem>>, %arg8: memref<1x32xf32, #tpu.memory_space<vmem>>, %arg9: memref<1x32xf32, #tpu.memory_space<vmem>>, %arg10: memref<32x128xbf16, #tpu.memory_space<vmem>>, %arg11: memref<1x128xf32, #tpu.memory_space<vmem>>, %arg12: memref<128x32xbf16, #tpu.memory_space<vmem>>, %arg13: memref<1x32xf32, #tpu.memory_space<vmem>>, %arg14: memref<1x8x32xf32, #tpu.memory_space<vmem>>, %arg15: memref<1x8x32xf32, #tpu.memory_space<vmem>>, %arg16: memref<1x4x8x8xbf16, #tpu.memory_space<vmem>>) attributes {dimension_semantics = [#tpu.dimension_semantics<parallel>], iteration_bounds = array<i64: 2>, scalar_prefetch = 0 : i64, scratch_operands = 0 : i64, tpu.core_type = #tpu.core_type<tc>, window_params = [{transform_indices = @transform_0, window_bounds = array<i64: 1, 8, 32>}, {pipeline_mode = #tpu.pipeline_mode<synchronous>, transform_indices = @transform_1, window_bounds = array<i64: 1, 32>}, {pipeline_mode = #tpu.pipeline_mode<synchronous>, transform_indices = @transform_2, window_bounds = array<i64: 1, 32>}, {pipeline_mode = #tpu.pipeline_mode<synchronous>, transform_indices = @transform_3, window_bounds = array<i64: 32, 96>}, {pipeline_mode = #tpu.pipeline_mode<synchronous>, transform_indices = @transform_4, window_bounds = array<i64: 1, 96>}, {pipeline_mode = #tpu.pipeline_mode<synchronous>, transform_indices = @transform_5, window_bounds = array<i64: 32, 32>}, {pipeline_mode = #tpu.pipeline_mode<synchronous>, transform_indices = @transform_6, window_bounds = array<i64: 1, 32>}, {pipeline_mode = #tpu.pipeline_mode<synchronous>, transform_indices = @transform_7, window_bounds = array<i64: 1, 32>}, {pipeline_mode = #tpu.pipeline_mode<synchronous>, transform_indices = @transform_8, window_bounds = array<i64: 1, 32>}, {pipeline_mode = #tpu.pipeline_mode<synchronous>, transform_indices = @transform_9, window_bounds = array<i64: 32, 128>}, {pipeline_mode = #tpu.pipeline_mode<synchronous>, transform_indices = @transform_10, window_bounds = array<i64: 1, 128>}, {pipeline_mode = #tpu.pipeline_mode<synchronous>, transform_indices = @transform_11, window_bounds = array<i64: 128, 32>}, {pipeline_mode = #tpu.pipeline_mode<synchronous>, transform_indices = @transform_12, window_bounds = array<i64: 1, 32>}, {transform_indices = @transform_13, window_bounds = array<i64: 1, 8, 32>}, {transform_indices = @transform_14, window_bounds = array<i64: 1, 8, 32>}, {transform_indices = @transform_15, window_bounds = array<i64: 1, 4, 8, 8>}]} {
    %c0 = arith.constant 0 : index
    %c0_0 = arith.constant 0 : index
    %c0_1 = arith.constant 0 : index
    %0 = vector.load %arg1[%c0, %c0_0, %c0_1] : memref<1x8x32xf32, #tpu.memory_space<vmem>>, vector<1x8x32xf32>
    %1 = vector.shape_cast %0 : vector<1x8x32xf32> to vector<8x32xf32>
    %c0_2 = arith.constant 0 : index
    %c0_3 = arith.constant 0 : index
    %2 = vector.load %arg2[%c0_2, %c0_3] : memref<1x32xf32, #tpu.memory_space<vmem>>, vector<1x32xf32>
    %c0_4 = arith.constant 0 : index
    %c0_5 = arith.constant 0 : index
    %3 = vector.load %arg3[%c0_4, %c0_5] : memref<1x32xf32, #tpu.memory_space<vmem>>, vector<1x32xf32>
    %cst = arith.constant dense<0.000000e+00> : vector<8xf32>
    %4 = vector.multi_reduction <add>, %1, %cst [1] : vector<8x32xf32> to vector<8xf32>
    %5 = vector.shape_cast %4 : vector<8xf32> to vector<8x1xf32>
    %cst_6 = arith.constant 3.200000e+01 : f32
    %6 = vector.broadcast %cst_6 : f32 to vector<8x1xf32>
    %7 = arith.divf %5, %6 : vector<8x1xf32>
    %8 = vector.broadcast %7 : vector<8x1xf32> to vector<8x32xf32>
    %9 = arith.subf %1, %8 : vector<8x32xf32>
    %10 = arith.mulf %9, %9 : vector<8x32xf32>
    %cst_7 = arith.constant dense<0.000000e+00> : vector<8xf32>
    %11 = vector.multi_reduction <add>, %10, %cst_7 [1] : vector<8x32xf32> to vector<8xf32>
    %12 = vector.shape_cast %11 : vector<8xf32> to vector<8x1xf32>
    %cst_8 = arith.constant 0.0322580636 : f32
    %13 = vector.broadcast %cst_8 : f32 to vector<8x1xf32>
    %14 = arith.mulf %12, %13 : vector<8x1xf32>
    %15 = math.sqrt %14 : vector<8x1xf32>
    %cst_9 = arith.constant 9.99999974E-6 : f32
    %16 = vector.broadcast %cst_9 : f32 to vector<8x1xf32>
    %17 = arith.addf %15, %16 : vector<8x1xf32>
    %18 = tpu.reciprocal %17 : vector<8x1xf32> -> vector<8x1xf32>
    %19 = vector.broadcast %7 : vector<8x1xf32> to vector<8x32xf32>
    %20 = arith.subf %1, %19 : vector<8x32xf32>
    %21 = vector.broadcast %2 : vector<1x32xf32> to vector<8x32xf32>
    %22 = arith.mulf %21, %20 : vector<8x32xf32>
    %23 = vector.broadcast %18 : vector<8x1xf32> to vector<8x32xf32>
    %24 = arith.mulf %22, %23 : vector<8x32xf32>
    %25 = vector.broadcast %3 : vector<1x32xf32> to vector<8x32xf32>
    %26 = arith.addf %24, %25 : vector<8x32xf32>
    %27 = arith.truncf %26 : vector<8x32xf32> to vector<8x32xbf16>
    %c0_10 = arith.constant 0 : index
    %c0_11 = arith.constant 0 : index
    %28 = vector.load %arg4[%c0_10, %c0_11] : memref<32x96xbf16, #tpu.memory_space<vmem>>, vector<32x96xbf16>
    %cst_12 = arith.constant dense<0.000000e+00> : vector<8x96xf32>
    %29 = tpu.matmul %27, %28, %cst_12 {dimension_numbers = #tpu.dot_dimension_numbers<[1], [0], [0], [1], [0, 0, 1, 1], [], []>} : vector<8x32xbf16>, vector<32x96xbf16>, vector<8x96xf32> -> vector<8x96xf32>
    %c0_13 = arith.constant 0 : index
    %c0_14 = arith.constant 0 : index
    %30 = vector.load %arg5[%c0_13, %c0_14] : memref<1x96xf32, #tpu.memory_space<vmem>>, vector<1x96xf32>
    %31 = vector.broadcast %30 : vector<1x96xf32> to vector<8x96xf32>
    %32 = arith.addf %29, %31 : vector<8x96xf32>
    %33 = vector.extract_strided_slice %32 {offsets = [0, 0], sizes = [8, 32], strides = [1, 1]} : vector<8x96xf32> to vector<8x32xf32>
    %34 = arith.truncf %33 : vector<8x32xf32> to vector<8x32xbf16>
    %35 = vector.shape_cast %34 : vector<8x32xbf16> to vector<1x8x4x8xbf16>
    %36 = tpu.transpose %35, [0, 2, 1, 3] : vector<1x8x4x8xbf16> -> vector<1x4x8x8xbf16>
    %37 = vector.shape_cast %36 : vector<1x4x8x8xbf16> to vector<4x8x8xbf16>
    %38 = vector.extract_strided_slice %32 {offsets = [0, 32], sizes = [8, 32], strides = [1, 1]} : vector<8x96xf32> to vector<8x32xf32>
    %39 = arith.truncf %38 : vector<8x32xf32> to vector<8x32xbf16>
    %40 = vector.shape_cast %39 : vector<8x32xbf16> to vector<1x8x4x8xbf16>
    %41 = tpu.transpose %40, [0, 2, 1, 3] : vector<1x8x4x8xbf16> -> vector<1x4x8x8xbf16>
    %42 = vector.shape_cast %41 : vector<1x4x8x8xbf16> to vector<4x8x8xbf16>
    %43 = vector.extract_strided_slice %32 {offsets = [0, 64], sizes = [8, 32], strides = [1, 1]} : vector<8x96xf32> to vector<8x32xf32>
    %44 = arith.truncf %43 : vector<8x32xf32> to vector<8x32xbf16>
    %45 = vector.shape_cast %44 : vector<8x32xbf16> to vector<1x8x4x8xbf16>
    %46 = tpu.transpose %45, [0, 2, 1, 3] : vector<1x8x4x8xbf16> -> vector<1x4x8x8xbf16>
    %47 = vector.shape_cast %46 : vector<1x4x8x8xbf16> to vector<4x8x8xbf16>
    %48 = tpu.iota {dimensions = array<i32: 0>} : vector<8x8xi32>
    %49 = tpu.iota {dimensions = array<i32: 1>} : vector<8x8xi32>
    %50 = arith.cmpi sge, %48, %49 : vector<8x8xi32>
    "tpu.trace_start"() <{level = 10 : i32, message = "gqd,gkd->gqk"}> : () -> ()
    %cst_15 = arith.constant dense<0.000000e+00> : vector<4x8x8xf32>
    %51 = tpu.matmul %37, %42, %cst_15 {dimension_numbers = #tpu.dot_dimension_numbers<[2], [2], [1], [1], [0, 0, 0, 1, 1, 1], [0], [0]>} : vector<4x8x8xbf16>, vector<4x8x8xbf16>, vector<4x8x8xf32> -> vector<4x8x8xf32>
    %cst_16 = arith.constant -1.000000e+30 : f32
    "tpu.trace_stop"() : () -> ()
    %52 = vector.shape_cast %50 : vector<8x8xi1> to vector<1x8x8xi1>
    %53 = vector.broadcast %52 : vector<1x8x8xi1> to vector<4x8x8xi1>
    %54 = vector.broadcast %cst_16 : f32 to vector<4x8x8xf32>
    %55 = arith.select %53, %51, %54 : vector<4x8x8xi1>, vector<4x8x8xf32>
    %cst_17 = arith.constant dense<0xFF800000> : vector<4x8xf32>
    %56 = vector.multi_reduction <maximumf>, %55, %cst_17 [2] : vector<4x8x8xf32> to vector<4x8xf32>
    %57 = vector.shape_cast %56 : vector<4x8xf32> to vector<4x8x1xf32>
    %58 = vector.broadcast %57 : vector<4x8x1xf32> to vector<4x8x8xf32>
    %59 = arith.subf %55, %58 : vector<4x8x8xf32>
    %60 = math.exp %59 : vector<4x8x8xf32>
    %cst_18 = arith.constant dense<0.000000e+00> : vector<4x8xf32>
    %61 = vector.multi_reduction <add>, %60, %cst_18 [2] : vector<4x8x8xf32> to vector<4x8xf32>
    %62 = vector.shape_cast %61 : vector<4x8xf32> to vector<4x8x1xf32>
    %63 = tpu.reciprocal %62 {approx = true} : vector<4x8x1xf32> -> vector<4x8x1xf32>
    %64 = vector.broadcast %63 : vector<4x8x1xf32> to vector<4x8x8xf32>
    %65 = arith.mulf %60, %64 : vector<4x8x8xf32>
    %66 = arith.truncf %65 : vector<4x8x8xf32> to vector<4x8x8xbf16>
    %67 = vector.shape_cast %66 : vector<4x8x8xbf16> to vector<1x4x8x8xbf16>
    %c0_19 = arith.constant 0 : index
    %c0_20 = arith.constant 0 : index
    %c0_21 = arith.constant 0 : index
    %c0_22 = arith.constant 0 : index
    %68 = vector.load %arg16[%c0_19, %c0_20, %c0_21, %c0_22] : memref<1x4x8x8xbf16, #tpu.memory_space<vmem>>, vector<1x4x8x8xbf16>
    tpu.vector_store %arg16[%c0_19, %c0_20, %c0_21, %c0_22], %67 {strides = array<i32>} : memref<1x4x8x8xbf16, #tpu.memory_space<vmem>>, vector<1x4x8x8xbf16>,
    "tpu.trace_start"() <{level = 10 : i32, message = "gqk,gkd->gqd"}> : () -> ()
    %cst_23 = arith.constant dense<0.000000e+00> : vector<4x8x8xf32>
    %69 = tpu.matmul %66, %47, %cst_23 {dimension_numbers = #tpu.dot_dimension_numbers<[2], [1], [1], [2], [0, 0, 0, 1, 1, 2], [0], [0]>} : vector<4x8x8xbf16>, vector<4x8x8xbf16>, vector<4x8x8xf32> -> vector<4x8x8xf32>
    "tpu.trace_stop"() : () -> ()
    %70 = vector.shape_cast %69 : vector<4x8x8xf32> to vector<1x4x8x8xf32>
    %71 = tpu.transpose %70, [0, 2, 1, 3] : vector<1x4x8x8xf32> -> vector<1x8x4x8xf32>
    %72 = vector.shape_cast %71 : vector<1x8x4x8xf32> to vector<8x32xf32>
    %73 = arith.truncf %72 : vector<8x32xf32> to vector<8x32xbf16>
    %c0_24 = arith.constant 0 : index
    %c0_25 = arith.constant 0 : index
    %74 = vector.load %arg6[%c0_24, %c0_25] : memref<32x32xbf16, #tpu.memory_space<vmem>>, vector<32x32xbf16>
    %cst_26 = arith.constant dense<0.000000e+00> : vector<8x32xf32>
    %75 = tpu.matmul %73, %74, %cst_26 {dimension_numbers = #tpu.dot_dimension_numbers<[1], [0], [0], [1], [0, 0, 1, 1], [], []>} : vector<8x32xbf16>, vector<32x32xbf16>, vector<8x32xf32> -> vector<8x32xf32>
    %c0_27 = arith.constant 0 : index
    %c0_28 = arith.constant 0 : index
    %76 = vector.load %arg7[%c0_27, %c0_28] : memref<1x32xf32, #tpu.memory_space<vmem>>, vector<1x32xf32>
    %77 = vector.broadcast %76 : vector<1x32xf32> to vector<8x32xf32>
    %78 = arith.addf %75, %77 : vector<8x32xf32>
    %79 = vector.shape_cast %78 : vector<8x32xf32> to vector<1x8x32xf32>
    %c0_29 = arith.constant 0 : index
    %c0_30 = arith.constant 0 : index
    %c0_31 = arith.constant 0 : index
    %80 = vector.load %arg15[%c0_29, %c0_30, %c0_31] : memref<1x8x32xf32, #tpu.memory_space<vmem>>, vector<1x8x32xf32>
    tpu.vector_store %arg15[%c0_29, %c0_30, %c0_31], %79 {strides = array<i32>} : memref<1x8x32xf32, #tpu.memory_space<vmem>>, vector<1x8x32xf32>,
    %81 = arith.addf %1, %78 : vector<8x32xf32>
    %c0_32 = arith.constant 0 : index
    %c0_33 = arith.constant 0 : index
    %82 = vector.load %arg8[%c0_32, %c0_33] : memref<1x32xf32, #tpu.memory_space<vmem>>, vector<1x32xf32>
    %c0_34 = arith.constant 0 : index
    %c0_35 = arith.constant 0 : index
    %83 = vector.load %arg9[%c0_34, %c0_35] : memref<1x32xf32, #tpu.memory_space<vmem>>, vector<1x32xf32>
    %cst_36 = arith.constant dense<0.000000e+00> : vector<8xf32>
    %84 = vector.multi_reduction <add>, %81, %cst_36 [1] : vector<8x32xf32> to vector<8xf32>
    %85 = vector.shape_cast %84 : vector<8xf32> to vector<8x1xf32>
    %cst_37 = arith.constant 3.200000e+01 : f32
    %86 = vector.broadcast %cst_37 : f32 to vector<8x1xf32>
    %87 = arith.divf %85, %86 : vector<8x1xf32>
    %88 = vector.broadcast %87 : vector<8x1xf32> to vector<8x32xf32>
    %89 = arith.subf %81, %88 : vector<8x32xf32>
    %90 = arith.mulf %89, %89 : vector<8x32xf32>
    %cst_38 = arith.constant dense<0.000000e+00> : vector<8xf32>
    %91 = vector.multi_reduction <add>, %90, %cst_38 [1] : vector<8x32xf32> to vector<8xf32>
    %92 = vector.shape_cast %91 : vector<8xf32> to vector<8x1xf32>
    %cst_39 = arith.constant 0.0322580636 : f32
    %93 = vector.broadcast %cst_39 : f32 to vector<8x1xf32>
    %94 = arith.mulf %92, %93 : vector<8x1xf32>
    %95 = math.sqrt %94 : vector<8x1xf32>
    %cst_40 = arith.constant 9.99999974E-6 : f32
    %96 = vector.broadcast %cst_40 : f32 to vector<8x1xf32>
    %97 = arith.addf %95, %96 : vector<8x1xf32>
    %98 = tpu.reciprocal %97 : vector<8x1xf32> -> vector<8x1xf32>
    %99 = vector.broadcast %87 : vector<8x1xf32> to vector<8x32xf32>
    %100 = arith.subf %81, %99 : vector<8x32xf32>
    %101 = vector.broadcast %82 : vector<1x32xf32> to vector<8x32xf32>
    %102 = arith.mulf %101, %100 : vector<8x32xf32>
    %103 = vector.broadcast %98 : vector<8x1xf32> to vector<8x32xf32>
    %104 = arith.mulf %102, %103 : vector<8x32xf32>
    %105 = vector.broadcast %83 : vector<1x32xf32> to vector<8x32xf32>
    %106 = arith.addf %104, %105 : vector<8x32xf32>
    %107 = arith.truncf %106 : vector<8x32xf32> to vector<8x32xbf16>
    %c0_41 = arith.constant 0 : index
    %c0_42 = arith.constant 0 : index
    %108 = vector.load %arg10[%c0_41, %c0_42] : memref<32x128xbf16, #tpu.memory_space<vmem>>, vector<32x128xbf16>
    %cst_43 = arith.constant dense<0.000000e+00> : vector<8x128xf32>
    %109 = tpu.matmul %107, %108, %cst_43 {dimension_numbers = #tpu.dot_dimension_numbers<[1], [0], [0], [1], [0, 0, 1, 1], [], []>} : vector<8x32xbf16>, vector<32x128xbf16>, vector<8x128xf32> -> vector<8x128xf32>
    %c0_44 = arith.constant 0 : index
    %c0_45 = arith.constant 0 : index
    %110 = vector.load %arg11[%c0_44, %c0_45] : memref<1x128xf32, #tpu.memory_space<vmem>>, vector<1x128xf32>
    %111 = vector.broadcast %110 : vector<1x128xf32> to vector<8x128xf32>
    %112 = arith.addf %109, %111 : vector<8x128xf32>
    %cst_46 = arith.constant 5.000000e-01 : f32
    %113 = vector.broadcast %cst_46 : f32 to vector<8x128xf32>
    %114 = arith.mulf %113, %112 : vector<8x128xf32>
    %115 = arith.mulf %112, %112 : vector<8x128xf32>
    %116 = arith.mulf %112, %115 : vector<8x128xf32>
    %cst_47 = arith.constant 4.471500e-02 : f32
    %117 = vector.broadcast %cst_47 : f32 to vector<8x128xf32>
    %118 = arith.mulf %117, %116 : vector<8x128xf32>
    %119 = arith.addf %112, %118 : vector<8x128xf32>
    %cst_48 = arith.constant 0.797884583 : f32
    %120 = vector.broadcast %cst_48 : f32 to vector<8x128xf32>
    %121 = arith.mulf %120, %119 : vector<8x128xf32>
    %122 = math.tanh %121 : vector<8x128xf32>
    %cst_49 = arith.constant 1.000000e+00 : f32
    %123 = vector.broadcast %cst_49 : f32 to vector<8x128xf32>
    %124 = arith.addf %123, %122 : vector<8x128xf32>
    %125 = arith.mulf %114, %124 : vector<8x128xf32>
    %126 = arith.truncf %125 : vector<8x128xf32> to vector<8x128xbf16>
    %c0_50 = arith.constant 0 : index
    %c0_51 = arith.constant 0 : index
    %127 = vector.load %arg12[%c0_50, %c0_51] : memref<128x32xbf16, #tpu.memory_space<vmem>>, vector<128x32xbf16>
    %cst_52 = arith.constant dense<0.000000e+00> : vector<8x32xf32>
    %128 = tpu.matmul %126, %127, %cst_52 {dimension_numbers = #tpu.dot_dimension_numbers<[1], [0], [0], [1], [0, 0, 1, 1], [], []>} : vector<8x128xbf16>, vector<128x32xbf16>, vector<8x32xf32> -> vector<8x32xf32>
    %c0_53 = arith.constant 0 : index
    %c0_54 = arith.constant 0 : index
    %129 = vector.load %arg13[%c0_53, %c0_54] : memref<1x32xf32, #tpu.memory_space<vmem>>, vector<1x32xf32>
    %130 = vector.broadcast %129 : vector<1x32xf32> to vector<8x32xf32>
    %131 = arith.addf %128, %130 : vector<8x32xf32>
    %132 = arith.addf %81, %131 : vector<8x32xf32>
    %133 = vector.shape_cast %132 : vector<8x32xf32> to vector<1x8x32xf32>
    %c0_55 = arith.constant 0 : index
    %c0_56 = arith.constant 0 : index
    %c0_57 = arith.constant 0 : index
    %134 = vector.load %arg14[%c0_55, %c0_56, %c0_57] : memref<1x8x32xf32, #tpu.memory_space<vmem>>, vector<1x8x32xf32>
    tpu.vector_store %arg14[%c0_55, %c0_56, %c0_57], %133 {strides = array<i32>} : memref<1x8x32xf32, #tpu.memory_space<vmem>>, vector<1x8x32xf32>,
    return
  }
  func.func @transform_0(%arg0: i32) -> (i32, i32, i32) {
    %c0_i32 = arith.constant 0 : i32
    %c0_i32_0 = arith.constant 0 : i32
    %c0_i32_1 = arith.constant 0 : i32
    return %arg0, %c0_i32, %c0_i32_0 : i32, i32, i32
  }
  func.func @transform_1(%arg0: i32) -> (i32, i32) {
    %c0_i32 = arith.constant 0 : i32
    %c0_i32_0 = arith.constant 0 : i32
    %c0_i32_1 = arith.constant 0 : i32
    return %c0_i32, %c0_i32_0 : i32, i32
  }
  func.func @transform_2(%arg0: i32) -> (i32, i32) {
    %c0_i32 = arith.constant 0 : i32
    %c0_i32_0 = arith.constant 0 : i32
    %c0_i32_1 = arith.constant 0 : i32
    return %c0_i32, %c0_i32_0 : i32, i32
  }
  func.func @transform_3(%arg0: i32) -> (i32, i32) {
    %c0_i32 = arith.constant 0 : i32
    %c0_i32_0 = arith.constant 0 : i32
    %c0_i32_1 = arith.constant 0 : i32
    return %c0_i32, %c0_i32_0 : i32, i32
  }
  func.func @transform_4(%arg0: i32) -> (i32, i32) {
    %c0_i32 = arith.constant 0 : i32
    %c0_i32_0 = arith.constant 0 : i32
    %c0_i32_1 = arith.constant 0 : i32
    return %c0_i32, %c0_i32_0 : i32, i32
  }
  func.func @transform_5(%arg0: i32) -> (i32, i32) {
    %c0_i32 = arith.constant 0 : i32
    %c0_i32_0 = arith.constant 0 : i32
    %c0_i32_1 = arith.constant 0 : i32
    return %c0_i32, %c0_i32_0 : i32, i32
  }
  func.func @transform_6(%arg0: i32) -> (i32, i32) {
    %c0_i32 = arith.constant 0 : i32
    %c0_i32_0 = arith.constant 0 : i32
    %c0_i32_1 = arith.constant 0 : i32
    return %c0_i32, %c0_i32_0 : i32, i32
  }
  func.func @transform_7(%arg0: i32) -> (i32, i32) {
    %c0_i32 = arith.constant 0 : i32
    %c0_i32_0 = arith.constant 0 : i32
    %c0_i32_1 = arith.constant 0 : i32
    return %c0_i32, %c0_i32_0 : i32, i32
  }
  func.func @transform_8(%arg0: i32) -> (i32, i32) {
    %c0_i32 = arith.constant 0 : i32
    %c0_i32_0 = arith.constant 0 : i32
    %c0_i32_1 = arith.constant 0 : i32
    return %c0_i32, %c0_i32_0 : i32, i32
  }
  func.func @transform_9(%arg0: i32) -> (i32, i32) {
    %c0_i32 = arith.constant 0 : i32
    %c0_i32_0 = arith.constant 0 : i32
    %c0_i32_1 = arith.constant 0 : i32
    return %c0_i32, %c0_i32_0 : i32, i32
  }
  func.func @transform_10(%arg0: i32) -> (i32, i32) {
    %c0_i32 = arith.constant 0 : i32
    %c0_i32_0 = arith.constant 0 : i32
    %c0_i32_1 = arith.constant 0 : i32
    return %c0_i32, %c0_i32_0 : i32, i32
  }
  func.func @transform_11(%arg0: i32) -> (i32, i32) {
    %c0_i32 = arith.constant 0 : i32
    %c0_i32_0 = arith.constant 0 : i32
    %c0_i32_1 = arith.constant 0 : i32
    return %c0_i32, %c0_i32_0 : i32, i32
  }
  func.func @transform_12(%arg0: i32) -> (i32, i32) {
    %c0_i32 = arith.constant 0 : i32
    %c0_i32_0 = arith.constant 0 : i32
    %c0_i32_1 = arith.constant 0 : i32
    return %c0_i32, %c0_i32_0 : i32, i32
  }
  func.func @transform_13(%arg0: i32) -> (i32, i32, i32) {
    %c0_i32 = arith.constant 0 : i32
    %c0_i32_0 = arith.constant 0 : i32
    %c0_i32_1 = arith.constant 0 : i32
    return %arg0, %c0_i32, %c0_i32_0 : i32, i32, i32
  }
  func.func @transform_14(%arg0: i32) -> (i32, i32, i32) {
    %c0_i32 = arith.constant 0 : i32
    %c0_i32_0 = arith.constant 0 : i32
    %c0_i32_1 = arith.constant 0 : i32
    return %arg0, %c0_i32, %c0_i32_0 : i32, i32, i32
  }
  func.func @transform_15(%arg0: i32) -> (i32, i32, i32, i32) {
    %c0_i32 = arith.constant 0 : i32
    %c0_i32_0 = arith.constant 0 : i32
    %c0_i32_1 = arith.constant 0 : i32
    %c0_i32_2 = arith.constant 0 : i32
    return %arg0, %c0_i32, %c0_i32_0, %c0_i32_1 : i32, i32, i32, i32
  }
}

</mosaic_0001>

<llo_original>
// kernel: tpu_custom_call.1
$region0: #{tpu_custom_call.1}
  #allocation0 [shape = 'u32[]', space=smem, size = 0x4, offset = 0x4, fixed_abs, tag = 'smem constant byte address 0x4 - core index']
  #allocation1 [shape = 'u32[144,128]{1,0:T(1,128)}', space=vmem, size = 0x12000, scoped, tag = 'internal scratch']
  %s0 = inlined_call_operand.vmem [shape: f32[2,8,32], index: 0, kind: input, shape index: {}]
  %s1 = inlined_call_operand.vmem [shape: f32[1,32], index: 1, kind: input, shape index: {}]
  %s2 = inlined_call_operand.vmem [shape: f32[1,32], index: 2, kind: input, shape index: {}]
  %s3 = inlined_call_operand.vmem [shape: bf16[32,96], index: 3, kind: input, shape index: {}]
  %s4 = inlined_call_operand.vmem [shape: f32[1,96], index: 4, kind: input, shape index: {}]
  %s5 = inlined_call_operand.vmem [shape: bf16[32,32], index: 5, kind: input, shape index: {}]
  %s6 = inlined_call_operand.vmem [shape: f32[1,32], index: 6, kind: input, shape index: {}]
  %s7 = inlined_call_operand.vmem [shape: f32[1,32], index: 7, kind: input, shape index: {}]
  %s8 = inlined_call_operand.vmem [shape: f32[1,32], index: 8, kind: input, shape index: {}]
  %s9 = inlined_call_operand.vmem [shape: bf16[32,128], index: 9, kind: input, shape index: {}]
  %s10 = inlined_call_operand.vmem [shape: f32[1,128], index: 10, kind: input, shape index: {}]
  %s11 = inlined_call_operand.vmem [shape: bf16[128,32], index: 11, kind: input, shape index: {}]
  %s12 = inlined_call_operand.vmem [shape: f32[1,32], index: 12, kind: input, shape index: {}]
  %s13 = inlined_call_operand.hbm [shape: f32[2,8,32], index: 13, kind: output, shape index: {0}]
  %s14 = inlined_call_operand.hbm [shape: f32[2,8,32], index: 14, kind: output, shape index: {1}]
  %s15 = inlined_call_operand.hbm [shape: bf16[2,4,8,8], index: 15, kind: output, shape index: {2}]
  %16 = xla_tuple %s13, %s14, %s15
  %s17 = sld [smem:[#allocation0]]
  $region101: #{tpu_custom_call.1} parent=0
    _
  %s19 = ssub.s32 1, %s17
  %s20 = scalar_select 0, %s19, %s17
  $region1: #{tpu_custom_call.1} parent=0
    #allocation2 [shape = 'u8[8192]{0}', space=vmem, size = 0x2000, scoped, tag = 'output window, operand 0']
    #allocation3 [shape = 's32[2]{0}', space=sflag, size = 0x8, scoped, tag = 'scoped memory for tpu_custom_call.1']
    #allocation4 [shape = 'u8[8192]{0}', space=vmem, size = 0x2000, scoped, tag = 'output window, operand 1']
    #allocation5 [shape = 's32[2]{0}', space=sflag, size = 0x8, scoped, tag = 'scoped memory for tpu_custom_call.1']
    #allocation6 [shape = 'u8[16384]{0}', space=vmem, size = 0x4000, scoped, tag = 'output window, operand 2']
    %21 = vsyncpa [#allocation3], 0
    %s22 = scalar_lea.sflag [#allocation3], 1
    %23 = vsyncpa %s22, 0
    %24 = vsyncpa [#allocation5], 0
    %s25 = scalar_lea.sflag [#allocation5], 1
    %26 = vsyncpa %s25, 0
    loop: start=0, step=1, limit=4
    $region2: #{tpu_custom_call.1} parent=1 // loop_pre_header
      _
    $region3: #{tpu_custom_call.1} parent=1 // loop_header
      %s28 = sphi 0, %s32
      %p29 = scmp.ge.s32.totalorder %s28, 4
      %s38 = sphi 0, %s40
      %s41 = sphi 0, %s38
      %s42 = sphi 0, %s41
      %s58 = sphi 0, %s42
      %s62 = sphi 0, %s62
      %s64 = sphi 0, %s62
      %s65 = sphi 0, %s64
      %s79 = sphi 0, %s65
      %s83 = sphi 0, %s83
      %s85 = sphi 0, %s83
      %s86 = sphi 0, %s85
      %s100 = sphi 0, %s86
      %s104 = sphi 0, %s104
      %s106 = sphi 0, %s104
      %s107 = sphi 0, %s106
      %s121 = sphi 0, %s107
      %s125 = sphi 0, %s125
      %s127 = sphi 0, %s125
      %s128 = sphi 0, %s127
      %s142 = sphi 0, %s128
      %s146 = sphi 0, %s146
      %s148 = sphi 0, %s146
      %s149 = sphi 0, %s148
      %s163 = sphi 0, %s149
      %s167 = sphi 0, %s167
      %s169 = sphi 0, %s167
      %s170 = sphi 0, %s169
      %s184 = sphi 0, %s170
      %s188 = sphi 0, %s188
      %s190 = sphi 0, %s188
      %s191 = sphi 0, %s190
      %s205 = sphi 0, %s191
      %s209 = sphi 0, %s209
      %s211 = sphi 0, %s209
      %s212 = sphi 0, %s211
      %s226 = sphi 0, %s212
      %s230 = sphi 0, %s230
      %s232 = sphi 0, %s230
      %s233 = sphi 0, %s232
      %s247 = sphi 0, %s233
      %s251 = sphi 0, %s251
      %s253 = sphi 0, %s251
      %s254 = sphi 0, %s253
      %s268 = sphi 0, %s254
      %s272 = sphi 0, %s272
      %s274 = sphi 0, %s272
      %s275 = sphi 0, %s274
      %s289 = sphi 0, %s275
      %s293 = sphi 0, %s293
      %s295 = sphi 0, %s293
      %s296 = sphi 0, %s295
      %s310 = sphi 0, %s296
      %s316 = sphi 0, %s318
      %s319 = sphi 0, %s316
      %s320 = sphi 0, %s319
      %s336 = sphi 0, %s320
      %s342 = sphi 0, %s344
      %s345 = sphi 0, %s342
      %s346 = sphi 0, %s345
      %s362 = sphi 0, %s346
      %s368 = sphi 0, %s370
      %s371 = sphi 0, %s368
      %s372 = sphi 0, %s371
      %s388 = sphi 0, %s372
    $region4: #{tpu_custom_call.1} parent=1 // loop_header_branch
      %31 = sbr.rel (%p29) target = $region8
    $region5: #{tpu_custom_call.1} parent=1 // loop_body
      %s33 = ssub.s32 %s28, 1
      %s34 = ssub.s32 %s28, 2
      %s35 = sadd.s32 %s28, 1
      %s36 = ssub.s32 %s28, %s35
      %p37 = scmp.eq.s32.totalorder %s36, 0
      %s39 = sadd.s32 %s38, 1
      %s40 = scalar_select %p37, %s38, %s39
      %p43 = pneg %p37
      %p44 = scmp.eq.s32.totalorder %s28, 1
      %p45 = por %p43, %p44
      %p46 = scmp.ne.s32.totalorder %s38, %s41
      %p47 = scmp.eq.s32.totalorder %s28, 0
      %p48 = por %p46, %p47
      %p49 = scmp.ne.s32.totalorder %s38, %s41
      %p50 = scmp.eq.s32.totalorder %s33, 1
      %p51 = por %p49, %p50
      %p52 = scmp.ne.s32.totalorder %s41, %s42
      %p53 = scmp.eq.s32.totalorder %s33, 0
      %p54 = por %p52, %p53
      %p55 = scmp.ne.s32.totalorder %s41, %s42
      %p56 = scmp.eq.s32.totalorder %s34, 1
      %p57 = por %p55, %p56
      %p59 = scmp.ne.s32.totalorder %s42, %s58
      %p60 = scmp.eq.s32.totalorder %s34, 0
      %p61 = por %p59, %p60
      %s63 = sadd.s32 %s62, 1
      %p66 = scmp.eq.s32.totalorder %s28, 1
      %p67 = scmp.ne.s32.totalorder %s62, %s64
      %p68 = scmp.eq.s32.totalorder %s28, 0
      %p69 = por %p67, %p68
      %p70 = scmp.ne.s32.totalorder %s62, %s64
      %p71 = scmp.eq.s32.totalorder %s33, 1
      %p72 = por %p70, %p71
      %p73 = scmp.ne.s32.totalorder %s64, %s65
      %p74 = scmp.eq.s32.totalorder %s33, 0
      %p75 = por %p73, %p74
      %p76 = scmp.ne.s32.totalorder %s64, %s65
      %p77 = scmp.eq.s32.totalorder %s34, 1
      %p78 = por %p76, %p77
      %p80 = scmp.ne.s32.totalorder %s65, %s79
      %p81 = scmp.eq.s32.totalorder %s34, 0
      %p82 = por %p80, %p81
      %s84 = sadd.s32 %s83, 1
      %p87 = scmp.eq.s32.totalorder %s28, 1
      %p88 = scmp.ne.s32.totalorder %s83, %s85
      %p89 = scmp.eq.s32.totalorder %s28, 0
      %p90 = por %p88, %p89
      %p91 = scmp.ne.s32.totalorder %s83, %s85
      %p92 = scmp.eq.s32.totalorder %s33, 1
      %p93 = por %p91, %p92
      %p94 = scmp.ne.s32.totalorder %s85, %s86
      %p95 = scmp.eq.s32.totalorder %s33, 0
      %p96 = por %p94, %p95
      %p97 = scmp.ne.s32.totalorder %s85, %s86
      %p98 = scmp.eq.s32.totalorder %s34, 1
      %p99 = por %p97, %p98
      %p101 = scmp.ne.s32.totalorder %s86, %s100
      %p102 = scmp.eq.s32.totalorder %s34, 0
      %p103 = por %p101, %p102
      %s105 = sadd.s32 %s104, 1
      %p108 = scmp.eq.s32.totalorder %s28, 1
      %p109 = scmp.ne.s32.totalorder %s104, %s106
      %p110 = scmp.eq.s32.totalorder %s28, 0
      %p111 = por %p109, %p110
      %p112 = scmp.ne.s32.totalorder %s104, %s106
      %p113 = scmp.eq.s32.totalorder %s33, 1
      %p114 = por %p112, %p113
      %p115 = scmp.ne.s32.totalorder %s106, %s107
      %p116 = scmp.eq.s32.totalorder %s33, 0
      %p117 = por %p115, %p116
      %p118 = scmp.ne.s32.totalorder %s106, %s107
      %p119 = scmp.eq.s32.totalorder %s34, 1
      %p120 = por %p118, %p119
      %p122 = scmp.ne.s32.totalorder %s107, %s121
      %p123 = scmp.eq.s32.totalorder %s34, 0
      %p124 = por %p122, %p123
      %s126 = sadd.s32 %s125, 1
      %p129 = scmp.eq.s32.totalorder %s28, 1
      %p130 = scmp.ne.s32.totalorder %s125, %s127
      %p131 = scmp.eq.s32.totalorder %s28, 0
      %p132 = por %p130, %p131
      %p133 = scmp.ne.s32.totalorder %s125, %s127
      %p134 = scmp.eq.s32.totalorder %s33, 1
      %p135 = por %p133, %p134
      %p136 = scmp.ne.s32.totalorder %s127, %s128
      %p137 = scmp.eq.s32.totalorder %s33, 0
      %p138 = por %p136, %p137
      %p139 = scmp.ne.s32.totalorder %s127, %s128
      %p140 = scmp.eq.s32.totalorder %s34, 1
      %p141 = por %p139, %p140
      %p143 = scmp.ne.s32.totalorder %s128, %s142
      %p144 = scmp.eq.s32.totalorder %s34, 0
      %p145 = por %p143, %p144
      %s147 = sadd.s32 %s146, 1
      %p150 = scmp.eq.s32.totalorder %s28, 1
      %p151 = scmp.ne.s32.totalorder %s146, %s148
      %p152 = scmp.eq.s32.totalorder %s28, 0
      %p153 = por %p151, %p152
      %p154 = scmp.ne.s32.totalorder %s146, %s148
      %p155 = scmp.eq.s32.totalorder %s33, 1
      %p156 = por %p154, %p155
      %p157 = scmp.ne.s32.totalorder %s148, %s149
      %p158 = scmp.eq.s32.totalorder %s33, 0
      %p159 = por %p157, %p158
      %p160 = scmp.ne.s32.totalorder %s148, %s149
      %p161 = scmp.eq.s32.totalorder %s34, 1
      %p162 = por %p160, %p161
      %p164 = scmp.ne.s32.totalorder %s149, %s163
      %p165 = scmp.eq.s32.totalorder %s34, 0
      %p166 = por %p164, %p165
      %s168 = sadd.s32 %s167, 1
      %p171 = scmp.eq.s32.totalorder %s28, 1
      %p172 = scmp.ne.s32.totalorder %s167, %s169
      %p173 = scmp.eq.s32.totalorder %s28, 0
      %p174 = por %p172, %p173
      %p175 = scmp.ne.s32.totalorder %s167, %s169
      %p176 = scmp.eq.s32.totalorder %s33, 1
      %p177 = por %p175, %p176
      %p178 = scmp.ne.s32.totalorder %s169, %s170
      %p179 = scmp.eq.s32.totalorder %s33, 0
      %p180 = por %p178, %p179
      %p181 = scmp.ne.s32.totalorder %s169, %s170
      %p182 = scmp.eq.s32.totalorder %s34, 1
      %p183 = por %p181, %p182
      %p185 = scmp.ne.s32.totalorder %s170, %s184
      %p186 = scmp.eq.s32.totalorder %s34, 0
      %p187 = por %p185, %p186
      %s189 = sadd.s32 %s188, 1
      %p192 = scmp.eq.s32.totalorder %s28, 1
      %p193 = scmp.ne.s32.totalorder %s188, %s190
      %p194 = scmp.eq.s32.totalorder %s28, 0
      %p195 = por %p193, %p194
      %p196 = scmp.ne.s32.totalorder %s188, %s190
      %p197 = scmp.eq.s32.totalorder %s33, 1
      %p198 = por %p196, %p197
      %p199 = scmp.ne.s32.totalorder %s190, %s191
      %p200 = scmp.eq.s32.totalorder %s33, 0
      %p201 = por %p199, %p200
      %p202 = scmp.ne.s32.totalorder %s190, %s191
      %p203 = scmp.eq.s32.totalorder %s34, 1
      %p204 = por %p202, %p203
      %p206 = scmp.ne.s32.totalorder %s191, %s205
      %p207 = scmp.eq.s32.totalorder %s34, 0
      %p208 = por %p206, %p207
      %s210 = sadd.s32 %s209, 1
      %p213 = scmp.eq.s32.totalorder %s28, 1
      %p214 = scmp.ne.s32.totalorder %s209, %s211
      %p215 = scmp.eq.s32.totalorder %s28, 0
      %p216 = por %p214, %p215
      %p217 = scmp.ne.s32.totalorder %s209, %s211
      %p218 = scmp.eq.s32.totalorder %s33, 1
      %p219 = por %p217, %p218
      %p220 = scmp.ne.s32.totalorder %s211, %s212
      %p221 = scmp.eq.s32.totalorder %s33, 0
      %p222 = por %p220, %p221
      %p223 = scmp.ne.s32.totalorder %s211, %s212
      %p224 = scmp.eq.s32.totalorder %s34, 1
      %p225 = por %p223, %p224
      %p227 = scmp.ne.s32.totalorder %s212, %s226
      %p228 = scmp.eq.s32.totalorder %s34, 0
      %p229 = por %p227, %p228
      %s231 = sadd.s32 %s230, 1
      %p234 = scmp.eq.s32.totalorder %s28, 1
      %p235 = scmp.ne.s32.totalorder %s230, %s232
      %p236 = scmp.eq.s32.totalorder %s28, 0
      %p237 = por %p235, %p236
      %p238 = scmp.ne.s32.totalorder %s230, %s232
      %p239 = scmp.eq.s32.totalorder %s33, 1
      %p240 = por %p238, %p239
      %p241 = scmp.ne.s32.totalorder %s232, %s233
      %p242 = scmp.eq.s32.totalorder %s33, 0
      %p243 = por %p241, %p242
      %p244 = scmp.ne.s32.totalorder %s232, %s233
      %p245 = scmp.eq.s32.totalorder %s34, 1
      %p246 = por %p244, %p245
      %p248 = scmp.ne.s32.totalorder %s233, %s247
      %p249 = scmp.eq.s32.totalorder %s34, 0
      %p250 = por %p248, %p249
      %s252 = sadd.s32 %s251, 1
      %p255 = scmp.eq.s32.totalorder %s28, 1
      %p256 = scmp.ne.s32.totalorder %s251, %s253
      %p257 = scmp.eq.s32.totalorder %s28, 0
      %p258 = por %p256, %p257
      %p259 = scmp.ne.s32.totalorder %s251, %s253
      %p260 = scmp.eq.s32.totalorder %s33, 1
      %p261 = por %p259, %p260
      %p262 = scmp.ne.s32.totalorder %s253, %s254
      %p263 = scmp.eq.s32.totalorder %s33, 0
      %p264 = por %p262, %p263
      %p265 = scmp.ne.s32.totalorder %s253, %s254
      %p266 = scmp.eq.s32.totalorder %s34, 1
      %p267 = por %p265, %p266
      %p269 = scmp.ne.s32.totalorder %s254, %s268
      %p270 = scmp.eq.s32.totalorder %s34, 0
      %p271 = por %p269, %p270
      %s273 = sadd.s32 %s272, 1
      %p276 = scmp.eq.s32.totalorder %s28, 1
      %p277 = scmp.ne.s32.totalorder %s272, %s274
      %p278 = scmp.eq.s32.totalorder %s28, 0
      %p279 = por %p277, %p278
      %p280 = scmp.ne.s32.totalorder %s272, %s274
      %p281 = scmp.eq.s32.totalorder %s33, 1
      %p282 = por %p280, %p281
      %p283 = scmp.ne.s32.totalorder %s274, %s275
      %p284 = scmp.eq.s32.totalorder %s33, 0
      %p285 = por %p283, %p284
      %p286 = scmp.ne.s32.totalorder %s274, %s275
      %p287 = scmp.eq.s32.totalorder %s34, 1
      %p288 = por %p286, %p287
      %p290 = scmp.ne.s32.totalorder %s275, %s289
      %p291 = scmp.eq.s32.totalorder %s34, 0
      %p292 = por %p290, %p291
      %s294 = sadd.s32 %s293, 1
      %p297 = scmp.eq.s32.totalorder %s28, 1
      %p298 = scmp.ne.s32.totalorder %s293, %s295
      %p299 = scmp.eq.s32.totalorder %s28, 0
      %p300 = por %p298, %p299
      %p301 = scmp.ne.s32.totalorder %s293, %s295
      %p302 = scmp.eq.s32.totalorder %s33, 1
      %p303 = por %p301, %p302
      %p304 = scmp.ne.s32.totalorder %s295, %s296
      %p305 = scmp.eq.s32.totalorder %s33, 0
      %p306 = por %p304, %p305
      %p307 = scmp.ne.s32.totalorder %s295, %s296
      %p308 = scmp.eq.s32.totalorder %s34, 1
      %p309 = por %p307, %p308
      %p311 = scmp.ne.s32.totalorder %s296, %s310
      %p312 = scmp.eq.s32.totalorder %s34, 0
      %p313 = por %p311, %p312
      %s314 = ssub.s32 %s28, %s35
      %p315 = scmp.eq.s32.totalorder %s314, 0
      %s317 = sadd.s32 %s316, 1
      %s318 = scalar_select %p315, %s316, %s317
      %p321 = pneg %p315
      %p322 = scmp.eq.s32.totalorder %s28, 1
      %p323 = por %p321, %p322
      %p324 = scmp.ne.s32.totalorder %s316, %s319
      %p325 = scmp.eq.s32.totalorder %s28, 0
      %p326 = por %p324, %p325
      %p327 = scmp.ne.s32.totalorder %s316, %s319
      %p328 = scmp.eq.s32.totalorder %s33, 1
      %p329 = por %p327, %p328
      %p330 = scmp.ne.s32.totalorder %s319, %s320
      %p331 = scmp.eq.s32.totalorder %s33, 0
      %p332 = por %p330, %p331
      %p333 = scmp.ne.s32.totalorder %s319, %s320
      %p334 = scmp.eq.s32.totalorder %s34, 1
      %p335 = por %p333, %p334
      %p337 = scmp.ne.s32.totalorder %s320, %s336
      %p338 = scmp.eq.s32.totalorder %s34, 0
      %p339 = por %p337, %p338
      %s340 = ssub.s32 %s28, %s35
      %p341 = scmp.eq.s32.totalorder %s340, 0
      %s343 = sadd.s32 %s342, 1
      %s344 = scalar_select %p341, %s342, %s343
      %p347 = pneg %p341
      %p348 = scmp.eq.s32.totalorder %s28, 1
      %p349 = por %p347, %p348
      %p350 = scmp.ne.s32.totalorder %s342, %s345
      %p351 = scmp.eq.s32.totalorder %s28, 0
      %p352 = por %p350, %p351
      %p353 = scmp.ne.s32.totalorder %s342, %s345
      %p354 = scmp.eq.s32.totalorder %s33, 1
      %p355 = por %p353, %p354
      %p356 = scmp.ne.s32.totalorder %s345, %s346
      %p357 = scmp.eq.s32.totalorder %s33, 0
      %p358 = por %p356, %p357
      %p359 = scmp.ne.s32.totalorder %s345, %s346
      %p360 = scmp.eq.s32.totalorder %s34, 1
      %p361 = por %p359, %p360
      %p363 = scmp.ne.s32.totalorder %s346, %s362
      %p364 = scmp.eq.s32.totalorder %s34, 0
      %p365 = por %p363, %p364
      %s366 = ssub.s32 %s28, %s35
      %p367 = scmp.eq.s32.totalorder %s366, 0
      %s369 = sadd.s32 %s368, 1
      %s370 = scalar_select %p367, %s368, %s369
      %p373 = pneg %p367
      %p374 = scmp.eq.s32.totalorder %s28, 1
      %p375 = por %p373, %p374
      %p376 = scmp.ne.s32.totalorder %s368, %s371
      %p377 = scmp.eq.s32.totalorder %s28, 0
      %p378 = por %p376, %p377
      %p379 = scmp.ne.s32.totalorder %s368, %s371
      %p380 = scmp.eq.s32.totalorder %s33, 1
      %p381 = por %p379, %p380
      %p382 = scmp.ne.s32.totalorder %s371, %s372
      %p383 = scmp.eq.s32.totalorder %s33, 0
      %p384 = por %p382, %p383
      %p385 = scmp.ne.s32.totalorder %s371, %s372
      %p386 = scmp.eq.s32.totalorder %s34, 1
      %p387 = por %p385, %p386
      %p389 = scmp.ne.s32.totalorder %s372, %s388
      %p390 = scmp.eq.s32.totalorder %s34, 0
      %p391 = por %p389, %p390
      %p392 = scmp.le.s32.totalorder 1, %s28
      %p393 = scmp.lt.s32.totalorder %s28, 3
      %p394 = pnand %p392, %p393
      %p395 = pneg %p394
      // Predicated region
      $region9: #{tpu_custom_call.1} parent=5 // pred_check
        _
      $region10: #{tpu_custom_call.1} parent=5 // pred_check_branch
        %397 = sbr.rel (%p394) target = $region12
      $region11: #{tpu_custom_call.1} parent=5 // pred_region
        %s398 = ssub.s32 %s28, 1
        // Predicated region
        $region13: #{tpu_custom_call.1} parent=11 // pred_check
          %p399 = pneg %p75
        $region14: #{tpu_custom_call.1} parent=11 // pred_check_branch
          %401 = sbr.rel (%p399) target = $region16
        $region15: #{tpu_custom_call.1} parent=11 // pred_region
          _
        $region16: #{tpu_custom_call.1} parent=11 // pred_fallthru
          _
        // Predicated region
        $region17: #{tpu_custom_call.1} parent=11 // pred_check
          %p402 = pneg %p96
        $region18: #{tpu_custom_call.1} parent=11 // pred_check_branch
          %404 = sbr.rel (%p402) target = $region20
        $region19: #{tpu_custom_call.1} parent=11 // pred_region
          _
        $region20: #{tpu_custom_call.1} parent=11 // pred_fallthru
          _
        // Predicated region
        $region21: #{tpu_custom_call.1} parent=11 // pred_check
          %p405 = pneg %p117
        $region22: #{tpu_custom_call.1} parent=11 // pred_check_branch
          %407 = sbr.rel (%p405) target = $region24
        $region23: #{tpu_custom_call.1} parent=11 // pred_region
          _
        $region24: #{tpu_custom_call.1} parent=11 // pred_fallthru
          _
        // Predicated region
        $region25: #{tpu_custom_call.1} parent=11 // pred_check
          %p408 = pneg %p138
        $region26: #{tpu_custom_call.1} parent=11 // pred_check_branch
          %410 = sbr.rel (%p408) target = $region28
        $region27: #{tpu_custom_call.1} parent=11 // pred_region
          _
        $region28: #{tpu_custom_call.1} parent=11 // pred_fallthru
          _
        // Predicated region
        $region29: #{tpu_custom_call.1} parent=11 // pred_check
          %p411 = pneg %p159
        $region30: #{tpu_custom_call.1} parent=11 // pred_check_branch
          %413 = sbr.rel (%p411) target = $region32
        $region31: #{tpu_custom_call.1} parent=11 // pred_region
          _
        $region32: #{tpu_custom_call.1} parent=11 // pred_fallthru
          _
        // Predicated region
        $region33: #{tpu_custom_call.1} parent=11 // pred_check
          %p414 = pneg %p180
        $region34: #{tpu_custom_call.1} parent=11 // pred_check_branch
          %416 = sbr.rel (%p414) target = $region36
        $region35: #{tpu_custom_call.1} parent=11 // pred_region
          _
        $region36: #{tpu_custom_call.1} parent=11 // pred_fallthru
          _
        // Predicated region
        $region37: #{tpu_custom_call.1} parent=11 // pred_check
          %p417 = pneg %p201
        $region38: #{tpu_custom_call.1} parent=11 // pred_check_branch
          %419 = sbr.rel (%p417) target = $region40
        $region39: #{tpu_custom_call.1} parent=11 // pred_region
          _
        $region40: #{tpu_custom_call.1} parent=11 // pred_fallthru
          _
        // Predicated region
        $region41: #{tpu_custom_call.1} parent=11 // pred_check
          %p420 = pneg %p222
        $region42: #{tpu_custom_call.1} parent=11 // pred_check_branch
          %422 = sbr.rel (%p420) target = $region44
        $region43: #{tpu_custom_call.1} parent=11 // pred_region
          _
        $region44: #{tpu_custom_call.1} parent=11 // pred_fallthru
          _
        // Predicated region
        $region45: #{tpu_custom_call.1} parent=11 // pred_check
          %p423 = pneg %p243
        $region46: #{tpu_custom_call.1} parent=11 // pred_check_branch
          %425 = sbr.rel (%p423) target = $region48
        $region47: #{tpu_custom_call.1} parent=11 // pred_region
          _
        $region48: #{tpu_custom_call.1} parent=11 // pred_fallthru
          _
        // Predicated region
        $region49: #{tpu_custom_call.1} parent=11 // pred_check
          %p426 = pneg %p264
        $region50: #{tpu_custom_call.1} parent=11 // pred_check_branch
          %428 = sbr.rel (%p426) target = $region52
        $region51: #{tpu_custom_call.1} parent=11 // pred_region
          _
        $region52: #{tpu_custom_call.1} parent=11 // pred_fallthru
          _
        // Predicated region
        $region53: #{tpu_custom_call.1} parent=11 // pred_check
          %p429 = pneg %p285
        $region54: #{tpu_custom_call.1} parent=11 // pred_check_branch
          %431 = sbr.rel (%p429) target = $region56
        $region55: #{tpu_custom_call.1} parent=11 // pred_region
          _
        $region56: #{tpu_custom_call.1} parent=11 // pred_fallthru
          _
        // Predicated region
        $region57: #{tpu_custom_call.1} parent=11 // pred_check
          %p432 = pneg %p306
        $region58: #{tpu_custom_call.1} parent=11 // pred_check_branch
          %434 = sbr.rel (%p432) target = $region60
        $region59: #{tpu_custom_call.1} parent=11 // pred_region
          _
        $region60: #{tpu_custom_call.1} parent=11 // pred_fallthru
          _
      $region12: #{tpu_custom_call.1} parent=5 // pred_fallthru
        _
      %p435 = scmp.lt.s32.totalorder %s28, 2
      // Predicated region
      $region61: #{tpu_custom_call.1} parent=5 // pred_check
        %p436 = pneg %p435
      $region62: #{tpu_custom_call.1} parent=5 // pred_check_branch
        %438 = sbr.rel (%p436) target = $region64
      $region63: #{tpu_custom_call.1} parent=5 // pred_region
        // Predicated region
        $region65: #{tpu_custom_call.1} parent=63 // pred_check
          %p439 = pneg %p48
        $region66: #{tpu_custom_call.1} parent=63 // pred_check_branch
          %441 = sbr.rel (%p439) target = $region68
        $region67: #{tpu_custom_call.1} parent=63 // pred_region
          %p442 = scmp.lt.s32.totalorder %s28, 1
          %s443 = scalar_select %p442, %s28, 1
          %s444 = smul.addr %s443, 8
          %s445 = scalar_lea.vmem %s0, %s444
        $region68: #{tpu_custom_call.1} parent=63 // pred_fallthru
          _
      $region64: #{tpu_custom_call.1} parent=5 // pred_fallthru
        _
      %p446 = scmp.le.s32.totalorder 1, %s28
      %p447 = scmp.lt.s32.totalorder %s28, 3
      %p448 = pnand %p446, %p447
      %p449 = pneg %p448
      // Predicated region
      $region69: #{tpu_custom_call.1} parent=5 // pred_check
        _
      $region70: #{tpu_custom_call.1} parent=5 // pred_check_branch
        %451 = sbr.rel (%p448) target = $region72
      $region71: #{tpu_custom_call.1} parent=5 // pred_region
        %s452 = ssub.s32 %s28, 1
        %p453 = scmp.lt.s32.totalorder %s33, 1
        %s454 = scalar_select %p453, %s33, 1
        %s455 = smul.addr %s454, 8
        %s456 = scalar_lea.vmem %s0, %s455
        %p457 = pneg %p54
        %p458 = pneg %p51
        %p459 = pneg %p75
        %p460 = pneg %p72
        %p461 = pneg %p96
        %p462 = pneg %p93
        %p463 = pneg %p117
        %p464 = pneg %p114
        %p465 = pneg %p138
        %p466 = pneg %p135
        %p467 = pneg %p159
        %p468 = pneg %p156
        %p469 = pneg %p180
        %p470 = pneg %p177
        %p471 = pneg %p201
        %p472 = pneg %p198
        %p473 = pneg %p222
        %p474 = pneg %p219
        %p475 = pneg %p243
        %p476 = pneg %p240
        %p477 = pneg %p264
        %p478 = pneg %p261
        %p479 = pneg %p285
        %p480 = pneg %p282
        %p481 = pneg %p306
        %p482 = pneg %p303
        %p483 = pneg %p332
        %p484 = pneg %p329
        %s485 = sand.u32 %s319, 1
        %s486 = scalar_lea.sflag [#allocation3], %s485
        %s487 = sand.u32 %s319, 1
        %s488 = smul.addr %s487, 8
        %s489 = scalar_lea.vmem [#allocation2], %s488
        %p490 = pneg %p358
        %p491 = pneg %p355
        %s492 = sand.u32 %s33, 1
        %s493 = scalar_lea.sflag [#allocation5], %s492
        %s494 = sand.u32 %s345, 1
        %s495 = smul.addr %s494, 8
        %s496 = scalar_lea.vmem [#allocation4], %s495
        %p497 = pneg %p384
        %p498 = pneg %p381
        %s499 = sand.u32 %s33, 1
        %s500 = scalar_lea.sflag [#allocation5], %s499
        %s501 = sand.u32 %s371, 1
        %s502 = smul.addr %s501, 16
        %s503 = scalar_lea.vmem [#allocation6], %s502
        %p504 = scmp.lt.s32.totalorder %s33, 1
        %s505 = scalar_select %p504, %s33, 1
        %s506 = smul.addr %s505, 8
        %s507 = scalar_lea.vmem %s0, %s506
        %v509 = vld [vmem:[%s507] sm:$0xff]
        %v510 = vld [vmem:[%s1] sm:$0x1]
        %v511 = vld [vmem:[%s2] sm:$0x1]
        %vm512 = vcmask 261120
        %v513 = vsel %vm512, %v509, 0.0
        %514 = vadd.xlane.f32.xlu0 %v513
        %v515 = vpop.xlane.xlu0 %514
        %v516 = vrcp.pop 32.0
        %v517 = vmul.f32 %v515, %v516
        %v518 = vsub.f32 %v509, %v517
        %v519 = vmul.f32 %v518, %v518
        %v520 = vsel %vm512, %v519, 0.0
        %521 = vadd.xlane.f32.xlu0 %v520
        %v522 = vpop.xlane.xlu0 %521
        %v523 = vmul.f32 %v522, 0.032258064
        %v524 = vrsqrt.pop %v523
        %v525 = vmul.f32 %v523, %v524
        %vm526 = vcmp.eq.f32.partialorder %v523, inf
        %v527 = vsel %vm526, %v523, %v525
        %vm528 = vcmp.eq.f32.partialorder %v523, 0.0
        %v529 = vand.u32 %v523, 2147483648
        %v530 = vsel %vm528, %v529, %v527
        %v531 = vadd.f32 %v530, 1e-05
        %v532 = vrcp.pop %v531
        %v534 = vlaneseq
        %v535 = vshrl.u32 %v534, 7
        %v536 = vsub.s32 0, %v535
        %v537 = vrot.slane %v510, %v536
        %v539 = vmul.f32 %v537, %v518
        %v540 = vmul.f32 %v539, %v532
        %v542 = vlaneseq
        %v543 = vshrl.u32 %v542, 7
        %v544 = vsub.s32 0, %v543
        %v545 = vrot.slane %v511, %v544
        %v547 = vadd.f32 %v540, %v545
        %v548 = vpack.c.bf16 %v547, %v547
        %v549 = vld [vmem:[%s3] sm:$0xf]
        %v550 = vld [vmem:[%s3 + $0x4] sm:$0xf]
        %v551 = vld [vmem:[%s3 + $0x8] sm:$0xf]
        %v552 = vld [vmem:[%s3 + $0xc] sm:$0xf]
        %v553 = vld [vmem:[%s4] sm:$0x1]
        %v555 = vlaneseq
        %v556 = vshrl.u32 %v555, 7
        %v557 = vsub.s32 0, %v556
        %v558 = vrot.slane %v553, %v557
        %v564 = vunpack.c.l.b16 %v549
        %v565 = vunpack.c.l.b16 %v550
        %v566 = vunpack.c.l.b16 %v551
        %v567 = vunpack.c.l.b16 %v552
        %v568 = vpack.c.b16 %v565, %v564
        %v569 = vpack.c.b16 %v567, %v566
        %v573 = vsel %vm512, %v548, 0
        %575 = vmatprep.subr.bf16.mxu0 0
        %576 = vmatpush1.bf16.msra.mxu0 %v568
        %577 = vmatprep.subr.bf16.mxu0 0
        %578 = vmatpush1.bf16.msra.mxu0 %v569
        %579 = vmatprep.subr.bf16.mxu0 0
        %580 = vmatpush1.bf16.msra.mxu0 0
        %581 = vmatprep.subr.bf16.mxu0 0
        %582 = vmatpush1.bf16.msra.mxu0 0
        %583 = vmatprep.subr.bf16.mxu0 0
        %584 = vmatpush1.bf16.msra.mxu0 0
        %585 = vmatprep.subr.bf16.mxu0 0
        %586 = vmatpush1.bf16.msra.mxu0 0
        %587 = vmatprep.subr.bf16.mxu0 0
        %588 = vmatpush1.bf16.msra.mxu0 0
        %589 = vmatprep.subr.bf16.mxu0 0
        %590 = vmatpush1.bf16.msra.mxu0 0
        %591 = vmatprep.subr.bf16.mxu0 0
        %592 = vmatpush1.bf16.msra.mxu0 0
        %593 = vmatprep.subr.bf16.mxu0 0
        %594 = vmatpush1.bf16.msra.mxu0 0
        %595 = vmatprep.subr.bf16.mxu0 0
        %596 = vmatpush1.bf16.msra.mxu0 0
        %597 = vmatprep.subr.bf16.mxu0 0
        %598 = vmatpush1.bf16.msra.mxu0 0
        %599 = vmatprep.subr.bf16.mxu0 0
        %600 = vmatpush1.bf16.msra.mxu0 0
        %601 = vmatprep.subr.bf16.mxu0 0
        %602 = vmatpush1.bf16.msra.mxu0 0
        %603 = vmatprep.subr.bf16.mxu0 0
        %604 = vmatpush1.bf16.msra.mxu0 0
        %605 = vmatprep.subr.bf16.mxu0 0
        %606 = vmatpush1.bf16.msra.mxu0 0
        %607 = vmatprep.mubr.bf16.mxu0 0
        %608 = vmatmul.mubr.bf16.gmra.mrb[0].mxu0 %v573
        %v609 = vpop.f32.mrb[0].mxu0
        %v610 = vadd.f32 %v558, %v609
        %v611 = vpop.f32.mrb[0].mxu0
        %v612 = vpop.f32.mrb[0].mxu0
        %v613 = vpop.f32.mrb[0].mxu0
        %614 = vdwg.mxu0
        %v615 = vpack.c.bf16 %v610, %v610
        %617 = vrot.lane.b32.xlu0 %v615, 120
        %v618 = vpop.permute.xlu0 %617
        %619 = vrot.lane.b32.xlu0 %v615, 112
        %v620 = vpop.permute.xlu0 %619
        %621 = vrot.lane.b32.xlu0 %v615, 104
        %v622 = vpop.permute.xlu0 %621
        %v624 = vunpack.c.l.s4 1983009808
        %v625 = vunpack.c.0.s8 %v624
        %v626 = vlaneseq
        %v627 = vshrl.u32 %v626, 7
        %v628 = vsub.s32 %v625, %v627
        %v629 = vrot.slane %v615, %v628
        %v632 = vunpack.c.l.s4 1983009808
        %v633 = vunpack.c.0.s8 %v632
        %v634 = vlaneseq
        %v635 = vshrl.u32 %v634, 7
        %v636 = vsub.s32 %v633, %v635
        %v637 = vrot.slane %v620, %v636
        %v638 = vcombine.low %v629, %v637
        %v639 = vcombine.high %v629, %v637
        %v641 = vunpack.c.l.s4 1934713408
        %v642 = vunpack.c.0.s8 %v641
        %v643 = vlaneseq
        %v644 = vshrl.u32 %v643, 7
        %v645 = vsub.s32 %v642, %v644
        %v646 = vrot.slane %v638, %v645
        %v648 = vunpack.c.l.s4 1934713408
        %v649 = vunpack.c.0.s8 %v648
        %v650 = vlaneseq
        %v651 = vshrl.u32 %v650, 7
        %v652 = vsub.s32 %v649, %v651
        %v653 = vrot.slane %v639, %v652
        %v654 = vcombine.high %v646, 0
        %v655 = vcombine.high %v653, 0
        %v658 = vunpack.c.l.s4 1983009808
        %v659 = vunpack.c.0.s8 %v658
        %v660 = vlaneseq
        %v661 = vshrl.u32 %v660, 7
        %v662 = vsub.s32 %v659, %v661
        %v663 = vrot.slane %v618, %v662
        %v666 = vunpack.c.l.s4 1983009808
        %v667 = vunpack.c.0.s8 %v666
        %v668 = vlaneseq
        %v669 = vshrl.u32 %v668, 7
        %v670 = vsub.s32 %v667, %v669
        %v671 = vrot.slane %v622, %v670
        %v672 = vcombine.low %v663, %v671
        %v673 = vcombine.high %v663, %v671
        %v675 = vunpack.c.l.s4 1934713408
        %v676 = vunpack.c.0.s8 %v675
        %v677 = vlaneseq
        %v678 = vshrl.u32 %v677, 7
        %v679 = vsub.s32 %v676, %v678
        %v680 = vrot.slane %v672, %v679
        %v682 = vunpack.c.l.s4 1934713408
        %v683 = vunpack.c.0.s8 %v682
        %v684 = vlaneseq
        %v685 = vshrl.u32 %v684, 7
        %v686 = vsub.s32 %v683, %v685
        %v687 = vrot.slane %v673, %v686
        %v688 = vcombine.high %v680, 0
        %v689 = vcombine.high %v687, 0
        %v692 = vpack.i.b16 %v680, %v646
        %v694 = vshrl.u32 %v646, 16
        %v695 = vshrl.u32 %v680, 16
        %v696 = vpack.i.b16 %v695, %v694
        %v700 = vpack.i.b16 %v688, %v654
        %v702 = vshrl.u32 %v654, 16
        %v703 = vshrl.u32 %v688, 16
        %v704 = vpack.i.b16 %v703, %v702
        %v708 = vpack.i.b16 %v687, %v653
        %v710 = vshrl.u32 %v653, 16
        %v711 = vshrl.u32 %v687, 16
        %v712 = vpack.i.b16 %v711, %v710
        %v716 = vpack.i.b16 %v689, %v655
        %v718 = vshrl.u32 %v655, 16
        %v719 = vshrl.u32 %v689, 16
        %v720 = vpack.i.b16 %v719, %v718
        %v722 = vcombine.low %v692, %v708
        %v724 = vunpack.c.l.s4 1983009808
        %v725 = vunpack.c.0.s8 %v724
        %v726 = vlaneseq
        %v727 = vshrl.u32 %v726, 7
        %v728 = vsub.s32 %v725, %v727
        %v729 = vrot.slane %v722, %v728
        %v730 = vcombine.low %v700, %v716
        %v732 = vunpack.c.l.s4 1983009808
        %v733 = vunpack.c.0.s8 %v732
        %v734 = vlaneseq
        %v735 = vshrl.u32 %v734, 7
        %v736 = vsub.s32 %v733, %v735
        %v737 = vrot.slane %v730, %v736
        %v738 = vcombine.low %v729, %v737
        %v740 = vunpack.c.l.s4 1934713408
        %v741 = vunpack.c.0.s8 %v740
        %v742 = vlaneseq
        %v743 = vshrl.u32 %v742, 7
        %v744 = vsub.s32 %v741, %v743
        %v745 = vrot.slane %v738, %v744
        %v746 = vcombine.high %v745, 0
        %v747 = vcombine.low %v696, %v712
        %v749 = vunpack.c.l.s4 1983009808
        %v750 = vunpack.c.0.s8 %v749
        %v751 = vlaneseq
        %v752 = vshrl.u32 %v751, 7
        %v753 = vsub.s32 %v750, %v752
        %v754 = vrot.slane %v747, %v753
        %v755 = vcombine.low %v704, %v720
        %v757 = vunpack.c.l.s4 1983009808
        %v758 = vunpack.c.0.s8 %v757
        %v759 = vlaneseq
        %v760 = vshrl.u32 %v759, 7
        %v761 = vsub.s32 %v758, %v760
        %v762 = vrot.slane %v755, %v761
        %v763 = vcombine.low %v754, %v762
        %v765 = vunpack.c.l.s4 1934713408
        %v766 = vunpack.c.0.s8 %v765
        %v767 = vlaneseq
        %v768 = vshrl.u32 %v767, 7
        %v769 = vsub.s32 %v766, %v768
        %v770 = vrot.slane %v763, %v769
        %v771 = vcombine.high %v770, 0
        %v774 = vpack.i.b16 %v770, %v745
        %v775 = vshrl.u32 %v745, 16
        %v776 = vshrl.u32 %v770, 16
        %v777 = vpack.i.b16 %v776, %v775
        %v780 = vpack.i.b16 %v771, %v746
        %v781 = vshrl.u32 %v746, 16
        %v782 = vshrl.u32 %v771, 16
        %v783 = vpack.i.b16 %v782, %v781
        %784 = vrot.lane.b32.xlu0 %v615, 96
        %v785 = vpop.permute.xlu0 %784
        %786 = vrot.lane.b32.xlu0 %v618, 96
        %v787 = vpop.permute.xlu0 %786
        %788 = vrot.lane.b32.xlu0 %v620, 96
        %v789 = vpop.permute.xlu0 %788
        %790 = vrot.lane.b32.xlu0 %v622, 96
        %v791 = vpop.permute.xlu0 %790
        %v794 = vunpack.c.l.s4 1983009808
        %v795 = vunpack.c.0.s8 %v794
        %v796 = vlaneseq
        %v797 = vshrl.u32 %v796, 7
        %v798 = vsub.s32 %v795, %v797
        %v799 = vrot.slane %v785, %v798
        %v802 = vunpack.c.l.s4 1983009808
        %v803 = vunpack.c.0.s8 %v802
        %v804 = vlaneseq
        %v805 = vshrl.u32 %v804, 7
        %v806 = vsub.s32 %v803, %v805
        %v807 = vrot.slane %v789, %v806
        %v808 = vcombine.low %v799, %v807
        %v809 = vcombine.high %v799, %v807
        %v811 = vunpack.c.l.s4 1934713408
        %v812 = vunpack.c.0.s8 %v811
        %v813 = vlaneseq
        %v814 = vshrl.u32 %v813, 7
        %v815 = vsub.s32 %v812, %v814
        %v816 = vrot.slane %v808, %v815
        %v818 = vunpack.c.l.s4 1934713408
        %v819 = vunpack.c.0.s8 %v818
        %v820 = vlaneseq
        %v821 = vshrl.u32 %v820, 7
        %v822 = vsub.s32 %v819, %v821
        %v823 = vrot.slane %v809, %v822
        %v824 = vcombine.high %v816, 0
        %v825 = vcombine.high %v823, 0
        %v828 = vunpack.c.l.s4 1983009808
        %v829 = vunpack.c.0.s8 %v828
        %v830 = vlaneseq
        %v831 = vshrl.u32 %v830, 7
        %v832 = vsub.s32 %v829, %v831
        %v833 = vrot.slane %v787, %v832
        %v836 = vunpack.c.l.s4 1983009808
        %v837 = vunpack.c.0.s8 %v836
        %v838 = vlaneseq
        %v839 = vshrl.u32 %v838, 7
        %v840 = vsub.s32 %v837, %v839
        %v841 = vrot.slane %v791, %v840
        %v842 = vcombine.low %v833, %v841
        %v843 = vcombine.high %v833, %v841
        %v845 = vunpack.c.l.s4 1934713408
        %v846 = vunpack.c.0.s8 %v845
        %v847 = vlaneseq
        %v848 = vshrl.u32 %v847, 7
        %v849 = vsub.s32 %v846, %v848
        %v850 = vrot.slane %v842, %v849
        %v852 = vunpack.c.l.s4 1934713408
        %v853 = vunpack.c.0.s8 %v852
        %v854 = vlaneseq
        %v855 = vshrl.u32 %v854, 7
        %v856 = vsub.s32 %v853, %v855
        %v857 = vrot.slane %v843, %v856
        %v858 = vcombine.high %v850, 0
        %v859 = vcombine.high %v857, 0
        %v862 = vpack.i.b16 %v850, %v816
        %v864 = vshrl.u32 %v816, 16
        %v865 = vshrl.u32 %v850, 16
        %v866 = vpack.i.b16 %v865, %v864
        %v870 = vpack.i.b16 %v858, %v824
        %v872 = vshrl.u32 %v824, 16
        %v873 = vshrl.u32 %v858, 16
        %v874 = vpack.i.b16 %v873, %v872
        %v878 = vpack.i.b16 %v857, %v823
        %v880 = vshrl.u32 %v823, 16
        %v881 = vshrl.u32 %v857, 16
        %v882 = vpack.i.b16 %v881, %v880
        %v886 = vpack.i.b16 %v859, %v825
        %v888 = vshrl.u32 %v825, 16
        %v889 = vshrl.u32 %v859, 16
        %v890 = vpack.i.b16 %v889, %v888
        %v892 = vcombine.low %v862, %v878
        %v894 = vunpack.c.l.s4 1983009808
        %v895 = vunpack.c.0.s8 %v894
        %v896 = vlaneseq
        %v897 = vshrl.u32 %v896, 7
        %v898 = vsub.s32 %v895, %v897
        %v899 = vrot.slane %v892, %v898
        %v900 = vcombine.low %v870, %v886
        %v902 = vunpack.c.l.s4 1983009808
        %v903 = vunpack.c.0.s8 %v902
        %v904 = vlaneseq
        %v905 = vshrl.u32 %v904, 7
        %v906 = vsub.s32 %v903, %v905
        %v907 = vrot.slane %v900, %v906
        %v908 = vcombine.low %v899, %v907
        %v910 = vunpack.c.l.s4 1934713408
        %v911 = vunpack.c.0.s8 %v910
        %v912 = vlaneseq
        %v913 = vshrl.u32 %v912, 7
        %v914 = vsub.s32 %v911, %v913
        %v915 = vrot.slane %v908, %v914
        %v916 = vcombine.high %v915, 0
        %v917 = vcombine.low %v866, %v882
        %v919 = vunpack.c.l.s4 1983009808
        %v920 = vunpack.c.0.s8 %v919
        %v921 = vlaneseq
        %v922 = vshrl.u32 %v921, 7
        %v923 = vsub.s32 %v920, %v922
        %v924 = vrot.slane %v917, %v923
        %v925 = vcombine.low %v874, %v890
        %v927 = vunpack.c.l.s4 1983009808
        %v928 = vunpack.c.0.s8 %v927
        %v929 = vlaneseq
        %v930 = vshrl.u32 %v929, 7
        %v931 = vsub.s32 %v928, %v930
        %v932 = vrot.slane %v925, %v931
        %v933 = vcombine.low %v924, %v932
        %v935 = vunpack.c.l.s4 1934713408
        %v936 = vunpack.c.0.s8 %v935
        %v937 = vlaneseq
        %v938 = vshrl.u32 %v937, 7
        %v939 = vsub.s32 %v936, %v938
        %v940 = vrot.slane %v933, %v939
        %v941 = vcombine.high %v940, 0
        %v944 = vpack.i.b16 %v940, %v915
        %v945 = vshrl.u32 %v915, 16
        %v946 = vshrl.u32 %v940, 16
        %v947 = vpack.i.b16 %v946, %v945
        %v950 = vpack.i.b16 %v941, %v916
        %v951 = vshrl.u32 %v916, 16
        %v952 = vshrl.u32 %v941, 16
        %v953 = vpack.i.b16 %v952, %v951
        %954 = vrot.lane.b32.xlu0 %v615, 64
        %v955 = vpop.permute.xlu0 %954
        %956 = vrot.lane.b32.xlu0 %v618, 64
        %v957 = vpop.permute.xlu0 %956
        %958 = vrot.lane.b32.xlu0 %v620, 64
        %v959 = vpop.permute.xlu0 %958
        %960 = vrot.lane.b32.xlu0 %v622, 64
        %v961 = vpop.permute.xlu0 %960
        %v964 = vunpack.c.l.s4 1983009808
        %v965 = vunpack.c.0.s8 %v964
        %v966 = vlaneseq
        %v967 = vshrl.u32 %v966, 7
        %v968 = vsub.s32 %v965, %v967
        %v969 = vrot.slane %v955, %v968
        %v972 = vunpack.c.l.s4 1983009808
        %v973 = vunpack.c.0.s8 %v972
        %v974 = vlaneseq
        %v975 = vshrl.u32 %v974, 7
        %v976 = vsub.s32 %v973, %v975
        %v977 = vrot.slane %v959, %v976
        %v978 = vcombine.low %v969, %v977
        %v979 = vcombine.high %v969, %v977
        %v981 = vunpack.c.l.s4 1934713408
        %v982 = vunpack.c.0.s8 %v981
        %v983 = vlaneseq
        %v984 = vshrl.u32 %v983, 7
        %v985 = vsub.s32 %v982, %v984
        %v986 = vrot.slane %v978, %v985
        %v988 = vunpack.c.l.s4 1934713408
        %v989 = vunpack.c.0.s8 %v988
        %v990 = vlaneseq
        %v991 = vshrl.u32 %v990, 7
        %v992 = vsub.s32 %v989, %v991
        %v993 = vrot.slane %v979, %v992
        %v994 = vcombine.high %v986, 0
        %v995 = vcombine.high %v993, 0
        %v998 = vunpack.c.l.s4 1983009808
        %v999 = vunpack.c.0.s8 %v998
        %v1000 = vlaneseq
        %v1001 = vshrl.u32 %v1000, 7
        %v1002 = vsub.s32 %v999, %v1001
        %v1003 = vrot.slane %v957, %v1002
        %v1006 = vunpack.c.l.s4 1983009808
        %v1007 = vunpack.c.0.s8 %v1006
        %v1008 = vlaneseq
        %v1009 = vshrl.u32 %v1008, 7
        %v1010 = vsub.s32 %v1007, %v1009
        %v1011 = vrot.slane %v961, %v1010
        %v1012 = vcombine.low %v1003, %v1011
        %v1013 = vcombine.high %v1003, %v1011
        %v1015 = vunpack.c.l.s4 1934713408
        %v1016 = vunpack.c.0.s8 %v1015
        %v1017 = vlaneseq
        %v1018 = vshrl.u32 %v1017, 7
        %v1019 = vsub.s32 %v1016, %v1018
        %v1020 = vrot.slane %v1012, %v1019
        %v1022 = vunpack.c.l.s4 1934713408
        %v1023 = vunpack.c.0.s8 %v1022
        %v1024 = vlaneseq
        %v1025 = vshrl.u32 %v1024, 7
        %v1026 = vsub.s32 %v1023, %v1025
        %v1027 = vrot.slane %v1013, %v1026
        %v1028 = vcombine.high %v1020, 0
        %v1029 = vcombine.high %v1027, 0
        %v1032 = vpack.i.b16 %v1020, %v986
        %v1034 = vshrl.u32 %v986, 16
        %v1035 = vshrl.u32 %v1020, 16
        %v1036 = vpack.i.b16 %v1035, %v1034
        %v1040 = vpack.i.b16 %v1028, %v994
        %v1042 = vshrl.u32 %v994, 16
        %v1043 = vshrl.u32 %v1028, 16
        %v1044 = vpack.i.b16 %v1043, %v1042
        %v1048 = vpack.i.b16 %v1027, %v993
        %v1050 = vshrl.u32 %v993, 16
        %v1051 = vshrl.u32 %v1027, 16
        %v1052 = vpack.i.b16 %v1051, %v1050
        %v1056 = vpack.i.b16 %v1029, %v995
        %v1058 = vshrl.u32 %v995, 16
        %v1059 = vshrl.u32 %v1029, 16
        %v1060 = vpack.i.b16 %v1059, %v1058
        %v1062 = vcombine.low %v1032, %v1048
        %v1064 = vunpack.c.l.s4 1983009808
        %v1065 = vunpack.c.0.s8 %v1064
        %v1066 = vlaneseq
        %v1067 = vshrl.u32 %v1066, 7
        %v1068 = vsub.s32 %v1065, %v1067
        %v1069 = vrot.slane %v1062, %v1068
        %v1070 = vcombine.low %v1040, %v1056
        %v1072 = vunpack.c.l.s4 1983009808
        %v1073 = vunpack.c.0.s8 %v1072
        %v1074 = vlaneseq
        %v1075 = vshrl.u32 %v1074, 7
        %v1076 = vsub.s32 %v1073, %v1075
        %v1077 = vrot.slane %v1070, %v1076
        %v1078 = vcombine.low %v1069, %v1077
        %v1080 = vunpack.c.l.s4 1934713408
        %v1081 = vunpack.c.0.s8 %v1080
        %v1082 = vlaneseq
        %v1083 = vshrl.u32 %v1082, 7
        %v1084 = vsub.s32 %v1081, %v1083
        %v1085 = vrot.slane %v1078, %v1084
        %v1086 = vcombine.high %v1085, 0
        %v1087 = vcombine.low %v1036, %v1052
        %v1089 = vunpack.c.l.s4 1983009808
        %v1090 = vunpack.c.0.s8 %v1089
        %v1091 = vlaneseq
        %v1092 = vshrl.u32 %v1091, 7
        %v1093 = vsub.s32 %v1090, %v1092
        %v1094 = vrot.slane %v1087, %v1093
        %v1095 = vcombine.low %v1044, %v1060
        %v1097 = vunpack.c.l.s4 1983009808
        %v1098 = vunpack.c.0.s8 %v1097
        %v1099 = vlaneseq
        %v1100 = vshrl.u32 %v1099, 7
        %v1101 = vsub.s32 %v1098, %v1100
        %v1102 = vrot.slane %v1095, %v1101
        %v1103 = vcombine.low %v1094, %v1102
        %v1105 = vunpack.c.l.s4 1934713408
        %v1106 = vunpack.c.0.s8 %v1105
        %v1107 = vlaneseq
        %v1108 = vshrl.u32 %v1107, 7
        %v1109 = vsub.s32 %v1106, %v1108
        %v1110 = vrot.slane %v1103, %v1109
        %v1111 = vcombine.high %v1110, 0
        %v1114 = vpack.i.b16 %v1110, %v1085
        %v1115 = vshrl.u32 %v1085, 16
        %v1116 = vshrl.u32 %v1110, 16
        %v1117 = vpack.i.b16 %v1116, %v1115
        %v1120 = vpack.i.b16 %v1111, %v1086
        %v1121 = vshrl.u32 %v1086, 16
        %v1122 = vshrl.u32 %v1111, 16
        %v1123 = vpack.i.b16 %v1122, %v1121
        %v1124 = vlaneseq
        %v1125 = vshrl.u32 %v1124, 7
        %v1126 = vlaneseq
        %v1127 = vand.u32 %v1126, 127
        %vm1128 = vcmp.ge.s32.totalorder %v1125, %v1127
        %vm1129 = vcmask 64512
        %v1131 = vsel %vm1129, %v774, 0
        %v1134 = vsel %vm1129, %v944, 0
        %1136 = vmatprep.subr.bf16.mxu0 0
        %1137 = vmatpush1.bf16.xpose.msra.mxu0 %v1134
        %1138 = vmatprep.subr.bf16.mxu0 0
        %1139 = vmatpush1.bf16.xpose.msra.mxu0 0
        %1140 = vmatprep.subr.bf16.mxu0 0
        %1141 = vmatpush1.bf16.xpose.msra.mxu0 0
        %1142 = vmatprep.subr.bf16.mxu0 0
        %1143 = vmatpush1.bf16.xpose.msra.mxu0 0
        %1144 = vmatprep.subr.bf16.mxu0 0
        %1145 = vmatpush1.bf16.xpose.msra.mxu0 0
        %1146 = vmatprep.subr.bf16.mxu0 0
        %1147 = vmatpush1.bf16.xpose.msra.mxu0 0
        %1148 = vmatprep.subr.bf16.mxu0 0
        %1149 = vmatpush1.bf16.xpose.msra.mxu0 0
        %1150 = vmatprep.subr.bf16.mxu0 0
        %1151 = vmatpush1.bf16.xpose.msra.mxu0 0
        %1152 = vmatprep.subr.bf16.mxu0 0
        %1153 = vmatpush1.bf16.xpose.msra.mxu0 0
        %1154 = vmatprep.subr.bf16.mxu0 0
        %1155 = vmatpush1.bf16.xpose.msra.mxu0 0
        %1156 = vmatprep.subr.bf16.mxu0 0
        %1157 = vmatpush1.bf16.xpose.msra.mxu0 0
        %1158 = vmatprep.subr.bf16.mxu0 0
        %1159 = vmatpush1.bf16.xpose.msra.mxu0 0
        %1160 = vmatprep.subr.bf16.mxu0 0
        %1161 = vmatpush1.bf16.xpose.msra.mxu0 0
        %1162 = vmatprep.subr.bf16.mxu0 0
        %1163 = vmatpush1.bf16.xpose.msra.mxu0 0
        %1164 = vmatprep.subr.bf16.mxu0 0
        %1165 = vmatpush1.bf16.xpose.msra.mxu0 0
        %1166 = vmatprep.subr.bf16.mxu0 0
        %1167 = vmatpush1.bf16.xpose.msra.mxu0 0
        %1168 = vmatprep.mubr.bf16.mxu0 0
        %1169 = vmatmul.mubr.bf16.gmra.mrb[0].mxu0 %v1131
        %v1170 = vpop.f32.mrb[0].mxu0
        %v1171 = vadd.f32 0.0, %v1170
        %v1172 = vpop.f32.mrb[0].mxu0
        %v1173 = vpop.f32.mrb[0].mxu0
        %v1174 = vpop.f32.mrb[0].mxu0
        %1175 = vdwg.mxu0
        %v1177 = vsel %vm1129, %v777, 0
        %v1180 = vsel %vm1129, %v947, 0
        %1182 = vmatprep.subr.bf16.mxu0 0
        %1183 = vmatpush1.bf16.xpose.msra.mxu0 %v1180
        %1184 = vmatprep.subr.bf16.mxu0 0
        %1185 = vmatpush1.bf16.xpose.msra.mxu0 0
        %1186 = vmatprep.subr.bf16.mxu0 0
        %1187 = vmatpush1.bf16.xpose.msra.mxu0 0
        %1188 = vmatprep.subr.bf16.mxu0 0
        %1189 = vmatpush1.bf16.xpose.msra.mxu0 0
        %1190 = vmatprep.subr.bf16.mxu0 0
        %1191 = vmatpush1.bf16.xpose.msra.mxu0 0
        %1192 = vmatprep.subr.bf16.mxu0 0
        %1193 = vmatpush1.bf16.xpose.msra.mxu0 0
        %1194 = vmatprep.subr.bf16.mxu0 0
        %1195 = vmatpush1.bf16.xpose.msra.mxu0 0
        %1196 = vmatprep.subr.bf16.mxu0 0
        %1197 = vmatpush1.bf16.xpose.msra.mxu0 0
        %1198 = vmatprep.subr.bf16.mxu0 0
        %1199 = vmatpush1.bf16.xpose.msra.mxu0 0
        %1200 = vmatprep.subr.bf16.mxu0 0
        %1201 = vmatpush1.bf16.xpose.msra.mxu0 0
        %1202 = vmatprep.subr.bf16.mxu0 0
        %1203 = vmatpush1.bf16.xpose.msra.mxu0 0
        %1204 = vmatprep.subr.bf16.mxu0 0
        %1205 = vmatpush1.bf16.xpose.msra.mxu0 0
        %1206 = vmatprep.subr.bf16.mxu0 0
        %1207 = vmatpush1.bf16.xpose.msra.mxu0 0
        %1208 = vmatprep.subr.bf16.mxu0 0
        %1209 = vmatpush1.bf16.xpose.msra.mxu0 0
        %1210 = vmatprep.subr.bf16.mxu0 0
        %1211 = vmatpush1.bf16.xpose.msra.mxu0 0
        %1212 = vmatprep.subr.bf16.mxu0 0
        %1213 = vmatpush1.bf16.xpose.msra.mxu0 0
        %1214 = vmatprep.mubr.bf16.mxu0 0
        %1215 = vmatmul.mubr.bf16.gmra.mrb[0].mxu0 %v1177
        %v1216 = vpop.f32.mrb[0].mxu0
        %v1217 = vadd.f32 0.0, %v1216
        %v1218 = vpop.f32.mrb[0].mxu0
        %v1219 = vpop.f32.mrb[0].mxu0
        %v1220 = vpop.f32.mrb[0].mxu0
        %1221 = vdwg.mxu0
        %v1223 = vsel %vm1129, %v780, 0
        %v1226 = vsel %vm1129, %v950, 0
        %1228 = vmatprep.subr.bf16.mxu0 0
        %1229 = vmatpush1.bf16.xpose.msra.mxu0 %v1226
        %1230 = vmatprep.subr.bf16.mxu0 0
        %1231 = vmatpush1.bf16.xpose.msra.mxu0 0
        %1232 = vmatprep.subr.bf16.mxu0 0
        %1233 = vmatpush1.bf16.xpose.msra.mxu0 0
        %1234 = vmatprep.subr.bf16.mxu0 0
        %1235 = vmatpush1.bf16.xpose.msra.mxu0 0
        %1236 = vmatprep.subr.bf16.mxu0 0
        %1237 = vmatpush1.bf16.xpose.msra.mxu0 0
        %1238 = vmatprep.subr.bf16.mxu0 0
        %1239 = vmatpush1.bf16.xpose.msra.mxu0 0
        %1240 = vmatprep.subr.bf16.mxu0 0
        %1241 = vmatpush1.bf16.xpose.msra.mxu0 0
        %1242 = vmatprep.subr.bf16.mxu0 0
        %1243 = vmatpush1.bf16.xpose.msra.mxu0 0
        %1244 = vmatprep.subr.bf16.mxu0 0
        %1245 = vmatpush1.bf16.xpose.msra.mxu0 0
        %1246 = vmatprep.subr.bf16.mxu0 0
        %1247 = vmatpush1.bf16.xpose.msra.mxu0 0
        %1248 = vmatprep.subr.bf16.mxu0 0
        %1249 = vmatpush1.bf16.xpose.msra.mxu0 0
        %1250 = vmatprep.subr.bf16.mxu0 0
        %1251 = vmatpush1.bf16.xpose.msra.mxu0 0
        %1252 = vmatprep.subr.bf16.mxu0 0
        %1253 = vmatpush1.bf16.xpose.msra.mxu0 0
        %1254 = vmatprep.subr.bf16.mxu0 0
        %1255 = vmatpush1.bf16.xpose.msra.mxu0 0
        %1256 = vmatprep.subr.bf16.mxu0 0
        %1257 = vmatpush1.bf16.xpose.msra.mxu0 0
        %1258 = vmatprep.subr.bf16.mxu0 0
        %1259 = vmatpush1.bf16.xpose.msra.mxu0 0
        %1260 = vmatprep.mubr.bf16.mxu0 0
        %1261 = vmatmul.mubr.bf16.gmra.mrb[0].mxu0 %v1223
        %v1262 = vpop.f32.mrb[0].mxu0
        %v1263 = vadd.f32 0.0, %v1262
        %v1264 = vpop.f32.mrb[0].mxu0
        %v1265 = vpop.f32.mrb[0].mxu0
        %v1266 = vpop.f32.mrb[0].mxu0
        %1267 = vdwg.mxu0
        %v1269 = vsel %vm1129, %v783, 0
        %v1272 = vsel %vm1129, %v953, 0
        %1274 = vmatprep.subr.bf16.mxu0 0
        %1275 = vmatpush1.bf16.xpose.msra.mxu0 %v1272
        %1276 = vmatprep.subr.bf16.mxu0 0
        %1277 = vmatpush1.bf16.xpose.msra.mxu0 0
        %1278 = vmatprep.subr.bf16.mxu0 0
        %1279 = vmatpush1.bf16.xpose.msra.mxu0 0
        %1280 = vmatprep.subr.bf16.mxu0 0
        %1281 = vmatpush1.bf16.xpose.msra.mxu0 0
        %1282 = vmatprep.subr.bf16.mxu0 0
        %1283 = vmatpush1.bf16.xpose.msra.mxu0 0
        %1284 = vmatprep.subr.bf16.mxu0 0
        %1285 = vmatpush1.bf16.xpose.msra.mxu0 0
        %1286 = vmatprep.subr.bf16.mxu0 0
        %1287 = vmatpush1.bf16.xpose.msra.mxu0 0
        %1288 = vmatprep.subr.bf16.mxu0 0
        %1289 = vmatpush1.bf16.xpose.msra.mxu0 0
        %1290 = vmatprep.subr.bf16.mxu0 0
        %1291 = vmatpush1.bf16.xpose.msra.mxu0 0
        %1292 = vmatprep.subr.bf16.mxu0 0
        %1293 = vmatpush1.bf16.xpose.msra.mxu0 0
        %1294 = vmatprep.subr.bf16.mxu0 0
        %1295 = vmatpush1.bf16.xpose.msra.mxu0 0
        %1296 = vmatprep.subr.bf16.mxu0 0
        %1297 = vmatpush1.bf16.xpose.msra.mxu0 0
        %1298 = vmatprep.subr.bf16.mxu0 0
        %1299 = vmatpush1.bf16.xpose.msra.mxu0 0
        %1300 = vmatprep.subr.bf16.mxu0 0
        %1301 = vmatpush1.bf16.xpose.msra.mxu0 0
        %1302 = vmatprep.subr.bf16.mxu0 0
        %1303 = vmatpush1.bf16.xpose.msra.mxu0 0
        %1304 = vmatprep.subr.bf16.mxu0 0
        %1305 = vmatpush1.bf16.xpose.msra.mxu0 0
        %1306 = vmatprep.mubr.bf16.mxu0 0
        %1307 = vmatmul.mubr.bf16.gmra.mrb[0].mxu0 %v1269
        %v1308 = vpop.f32.mrb[0].mxu0
        %v1309 = vadd.f32 0.0, %v1308
        %v1310 = vpop.f32.mrb[0].mxu0
        %v1311 = vpop.f32.mrb[0].mxu0
        %v1312 = vpop.f32.mrb[0].mxu0
        %1313 = vdwg.mxu0
        %v1314 = vsel %vm1128, 1, 0
        %vm1315 = vcmp.eq.s32.totalorder %v1314, 1
        %v1316 = vsel %vm1315, %v1171, -1e+30
        %v1317 = vsel %vm1315, %v1217, -1e+30
        %v1318 = vsel %vm1315, %v1263, -1e+30
        %v1319 = vsel %vm1315, %v1309, -1e+30
        %v1320 = vsel %vm1129, %v1316, -inf
        %1321 = vmax.xlane.f32.xlu0 %v1320
        %v1322 = vpop.xlane.xlu0 %1321
        %v1323 = vsel %vm1129, %v1317, -inf
        %1324 = vmax.xlane.f32.xlu0 %v1323
        %v1325 = vpop.xlane.xlu0 %1324
        %v1326 = vsel %vm1129, %v1318, -inf
        %1327 = vmax.xlane.f32.xlu0 %v1326
        %v1328 = vpop.xlane.xlu0 %1327
        %v1329 = vsel %vm1129, %v1319, -inf
        %1330 = vmax.xlane.f32.xlu0 %v1329
        %v1331 = vpop.xlane.xlu0 %1330
        %v1332 = vsub.f32 %v1316, %v1322
        %v1333 = vsub.f32 %v1317, %v1325
        %v1334 = vsub.f32 %v1318, %v1328
        %v1335 = vsub.f32 %v1319, %v1331
        %v1336 = vmul.f32 %v1332, 1.442695
        %v1337 = vpow.pop %v1336
        %v1338 = vmul.f32 %v1333, 1.442695
        %v1339 = vpow.pop %v1338
        %v1340 = vmul.f32 %v1334, 1.442695
        %v1341 = vpow.pop %v1340
        %v1342 = vmul.f32 %v1335, 1.442695
        %v1343 = vpow.pop %v1342
        %v1344 = vsel %vm1129, %v1337, 0.0
        %1345 = vadd.xlane.f32.xlu0 %v1344
        %v1346 = vpop.xlane.xlu0 %1345
        %v1347 = vsel %vm1129, %v1339, 0.0
        %1348 = vadd.xlane.f32.xlu0 %v1347
        %v1349 = vpop.xlane.xlu0 %1348
        %v1350 = vsel %vm1129, %v1341, 0.0
        %1351 = vadd.xlane.f32.xlu0 %v1350
        %v1352 = vpop.xlane.xlu0 %1351
        %v1353 = vsel %vm1129, %v1343, 0.0
        %1354 = vadd.xlane.f32.xlu0 %v1353
        %v1355 = vpop.xlane.xlu0 %1354
        %v1356 = vrcp.pop %v1346
        %v1357 = vrcp.pop %v1349
        %v1358 = vrcp.pop %v1352
        %v1359 = vrcp.pop %v1355
        %v1360 = vmul.f32 %v1337, %v1356
        %v1361 = vmul.f32 %v1339, %v1357
        %v1362 = vmul.f32 %v1341, %v1358
        %v1363 = vmul.f32 %v1343, %v1359
        %v1364 = vpack.c.bf16 %v1360, %v1360
        %v1365 = vpack.c.bf16 %v1361, %v1361
        %v1366 = vpack.c.bf16 %v1362, %v1362
        %v1367 = vpack.c.bf16 %v1363, %v1363
        %vm1368 = vcmask 60416
        %1369 = vst.msk [vmem:[%s503] sm:$0xf] %vm1368, %v1364
        %1370 = vst.msk [vmem:[%s503 + $0x4] sm:$0xf] %vm1368, %v1365
        %1371 = vst.msk [vmem:[%s503 + $0x8] sm:$0xf] %vm1368, %v1366
        %1372 = vst.msk [vmem:[%s503 + $0xc] sm:$0xf] %vm1368, %v1367
        %v1374 = vsel %vm1129, %v1364, 0
        %vm1376 = vcmask 1043456
        %v1378 = vsel %vm1376, %v1114, 0
        %1380 = vmatprep.subr.bf16.mxu0 0
        %1381 = vmatpush1.bf16.msra.mxu0 %v1378
        %1382 = vmatprep.subr.bf16.mxu0 0
        %1383 = vmatpush1.bf16.msra.mxu0 0
        %1384 = vmatprep.subr.bf16.mxu0 0
        %1385 = vmatpush1.bf16.msra.mxu0 0
        %1386 = vmatprep.subr.bf16.mxu0 0
        %1387 = vmatpush1.bf16.msra.mxu0 0
        %1388 = vmatprep.subr.bf16.mxu0 0
        %1389 = vmatpush1.bf16.msra.mxu0 0
        %1390 = vmatprep.subr.bf16.mxu0 0
        %1391 = vmatpush1.bf16.msra.mxu0 0
        %1392 = vmatprep.subr.bf16.mxu0 0
        %1393 = vmatpush1.bf16.msra.mxu0 0
        %1394 = vmatprep.subr.bf16.mxu0 0
        %1395 = vmatpush1.bf16.msra.mxu0 0
        %1396 = vmatprep.subr.bf16.mxu0 0
        %1397 = vmatpush1.bf16.msra.mxu0 0
        %1398 = vmatprep.subr.bf16.mxu0 0
        %1399 = vmatpush1.bf16.msra.mxu0 0
        %1400 = vmatprep.subr.bf16.mxu0 0
        %1401 = vmatpush1.bf16.msra.mxu0 0
        %1402 = vmatprep.subr.bf16.mxu0 0
        %1403 = vmatpush1.bf16.msra.mxu0 0
        %1404 = vmatprep.subr.bf16.mxu0 0
        %1405 = vmatpush1.bf16.msra.mxu0 0
        %1406 = vmatprep.subr.bf16.mxu0 0
        %1407 = vmatpush1.bf16.msra.mxu0 0
        %1408 = vmatprep.subr.bf16.mxu0 0
        %1409 = vmatpush1.bf16.msra.mxu0 0
        %1410 = vmatprep.subr.bf16.mxu0 0
        %1411 = vmatpush1.bf16.msra.mxu0 0
        %1412 = vmatprep.mubr.bf16.mxu0 0
        %1413 = vmatmul.mubr.bf16.gmra.mrb[0].mxu0 %v1374
        %v1414 = vpop.f32.mrb[0].mxu0
        %v1415 = vadd.f32 0.0, %v1414
        %v1416 = vpop.f32.mrb[0].mxu0
        %v1417 = vpop.f32.mrb[0].mxu0
        %v1418 = vpop.f32.mrb[0].mxu0
        %1419 = vdwg.mxu0
        %v1421 = vsel %vm1129, %v1365, 0
        %v1424 = vsel %vm1376, %v1117, 0
        %1426 = vmatprep.subr.bf16.mxu0 0
        %1427 = vmatpush1.bf16.msra.mxu0 %v1424
        %1428 = vmatprep.subr.bf16.mxu0 0
        %1429 = vmatpush1.bf16.msra.mxu0 0
        %1430 = vmatprep.subr.bf16.mxu0 0
        %1431 = vmatpush1.bf16.msra.mxu0 0
        %1432 = vmatprep.subr.bf16.mxu0 0
        %1433 = vmatpush1.bf16.msra.mxu0 0
        %1434 = vmatprep.subr.bf16.mxu0 0
        %1435 = vmatpush1.bf16.msra.mxu0 0
        %1436 = vmatprep.subr.bf16.mxu0 0
        %1437 = vmatpush1.bf16.msra.mxu0 0
        %1438 = vmatprep.subr.bf16.mxu0 0
        %1439 = vmatpush1.bf16.msra.mxu0 0
        %1440 = vmatprep.subr.bf16.mxu0 0
        %1441 = vmatpush1.bf16.msra.mxu0 0
        %1442 = vmatprep.subr.bf16.mxu0 0
        %1443 = vmatpush1.bf16.msra.mxu0 0
        %1444 = vmatprep.subr.bf16.mxu0 0
        %1445 = vmatpush1.bf16.msra.mxu0 0
        %1446 = vmatprep.subr.bf16.mxu0 0
        %1447 = vmatpush1.bf16.msra.mxu0 0
        %1448 = vmatprep.subr.bf16.mxu0 0
        %1449 = vmatpush1.bf16.msra.mxu0 0
        %1450 = vmatprep.subr.bf16.mxu0 0
        %1451 = vmatpush1.bf16.msra.mxu0 0
        %1452 = vmatprep.subr.bf16.mxu0 0
        %1453 = vmatpush1.bf16.msra.mxu0 0
        %1454 = vmatprep.subr.bf16.mxu0 0
        %1455 = vmatpush1.bf16.msra.mxu0 0
        %1456 = vmatprep.subr.bf16.mxu0 0
        %1457 = vmatpush1.bf16.msra.mxu0 0
        %1458 = vmatprep.mubr.bf16.mxu0 0
        %1459 = vmatmul.mubr.bf16.gmra.mrb[0].mxu0 %v1421
        %v1460 = vpop.f32.mrb[0].mxu0
        %v1461 = vadd.f32 0.0, %v1460
        %v1462 = vpop.f32.mrb[0].mxu0
        %v1463 = vpop.f32.mrb[0].mxu0
        %v1464 = vpop.f32.mrb[0].mxu0
        %1465 = vdwg.mxu0
        %v1467 = vsel %vm1129, %v1366, 0
        %v1470 = vsel %vm1376, %v1120, 0
        %1472 = vmatprep.subr.bf16.mxu0 0
        %1473 = vmatpush1.bf16.msra.mxu0 %v1470
        %1474 = vmatprep.subr.bf16.mxu0 0
        %1475 = vmatpush1.bf16.msra.mxu0 0
        %1476 = vmatprep.subr.bf16.mxu0 0
        %1477 = vmatpush1.bf16.msra.mxu0 0
        %1478 = vmatprep.subr.bf16.mxu0 0
        %1479 = vmatpush1.bf16.msra.mxu0 0
        %1480 = vmatprep.subr.bf16.mxu0 0
        %1481 = vmatpush1.bf16.msra.mxu0 0
        %1482 = vmatprep.subr.bf16.mxu0 0
        %1483 = vmatpush1.bf16.msra.mxu0 0
        %1484 = vmatprep.subr.bf16.mxu0 0
        %1485 = vmatpush1.bf16.msra.mxu0 0
        %1486 = vmatprep.subr.bf16.mxu0 0
        %1487 = vmatpush1.bf16.msra.mxu0 0
        %1488 = vmatprep.subr.bf16.mxu0 0
        %1489 = vmatpush1.bf16.msra.mxu0 0
        %1490 = vmatprep.subr.bf16.mxu0 0
        %1491 = vmatpush1.bf16.msra.mxu0 0
        %1492 = vmatprep.subr.bf16.mxu0 0
        %1493 = vmatpush1.bf16.msra.mxu0 0
        %1494 = vmatprep.subr.bf16.mxu0 0
        %1495 = vmatpush1.bf16.msra.mxu0 0
        %1496 = vmatprep.subr.bf16.mxu0 0
        %1497 = vmatpush1.bf16.msra.mxu0 0
        %1498 = vmatprep.subr.bf16.mxu0 0
        %1499 = vmatpush1.bf16.msra.mxu0 0
        %1500 = vmatprep.subr.bf16.mxu0 0
        %1501 = vmatpush1.bf16.msra.mxu0 0
        %1502 = vmatprep.subr.bf16.mxu0 0
        %1503 = vmatpush1.bf16.msra.mxu0 0
        %1504 = vmatprep.mubr.bf16.mxu0 0
        %1505 = vmatmul.mubr.bf16.gmra.mrb[0].mxu0 %v1467
        %v1506 = vpop.f32.mrb[0].mxu0
        %v1507 = vadd.f32 0.0, %v1506
        %v1508 = vpop.f32.mrb[0].mxu0
        %v1509 = vpop.f32.mrb[0].mxu0
        %v1510 = vpop.f32.mrb[0].mxu0
        %1511 = vdwg.mxu0
        %v1513 = vsel %vm1129, %v1367, 0
        %v1516 = vsel %vm1376, %v1123, 0
        %1518 = vmatprep.subr.bf16.mxu0 0
        %1519 = vmatpush1.bf16.msra.mxu0 %v1516
        %1520 = vmatprep.subr.bf16.mxu0 0
        %1521 = vmatpush1.bf16.msra.mxu0 0
        %1522 = vmatprep.subr.bf16.mxu0 0
        %1523 = vmatpush1.bf16.msra.mxu0 0
        %1524 = vmatprep.subr.bf16.mxu0 0
        %1525 = vmatpush1.bf16.msra.mxu0 0
        %1526 = vmatprep.subr.bf16.mxu0 0
        %1527 = vmatpush1.bf16.msra.mxu0 0
        %1528 = vmatprep.subr.bf16.mxu0 0
        %1529 = vmatpush1.bf16.msra.mxu0 0
        %1530 = vmatprep.subr.bf16.mxu0 0
        %1531 = vmatpush1.bf16.msra.mxu0 0
        %1532 = vmatprep.subr.bf16.mxu0 0
        %1533 = vmatpush1.bf16.msra.mxu0 0
        %1534 = vmatprep.subr.bf16.mxu0 0
        %1535 = vmatpush1.bf16.msra.mxu0 0
        %1536 = vmatprep.subr.bf16.mxu0 0
        %1537 = vmatpush1.bf16.msra.mxu0 0
        %1538 = vmatprep.subr.bf16.mxu0 0
        %1539 = vmatpush1.bf16.msra.mxu0 0
        %1540 = vmatprep.subr.bf16.mxu0 0
        %1541 = vmatpush1.bf16.msra.mxu0 0
        %1542 = vmatprep.subr.bf16.mxu0 0
        %1543 = vmatpush1.bf16.msra.mxu0 0
        %1544 = vmatprep.subr.bf16.mxu0 0
        %1545 = vmatpush1.bf16.msra.mxu0 0
        %1546 = vmatprep.subr.bf16.mxu0 0
        %1547 = vmatpush1.bf16.msra.mxu0 0
        %1548 = vmatprep.subr.bf16.mxu0 0
        %1549 = vmatpush1.bf16.msra.mxu0 0
        %1550 = vmatprep.mubr.bf16.mxu0 0
        %1551 = vmatmul.mubr.bf16.gmra.mrb[0].mxu0 %v1513
        %v1552 = vpop.f32.mrb[0].mxu0
        %v1553 = vadd.f32 0.0, %v1552
        %v1554 = vpop.f32.mrb[0].mxu0
        %v1555 = vpop.f32.mrb[0].mxu0
        %v1556 = vpop.f32.mrb[0].mxu0
        %1557 = vdwg.mxu0
        %v1558 = vcombine.low %v1415, %v1507
        %v1559 = vcombine.high %v1415, %v1507
        %v1561 = vunpack.c.l.s4 1983009808
        %v1562 = vunpack.c.0.s8 %v1561
        %v1563 = vlaneseq
        %v1564 = vshrl.u32 %v1563, 7
        %v1565 = vsub.s32 %v1562, %v1564
        %v1566 = vrot.slane %v1558, %v1565
        %v1568 = vunpack.c.l.s4 1983009808
        %v1569 = vunpack.c.0.s8 %v1568
        %v1570 = vlaneseq
        %v1571 = vshrl.u32 %v1570, 7
        %v1572 = vsub.s32 %v1569, %v1571
        %v1573 = vrot.slane %v1559, %v1572
        %v1574 = vcombine.low %v1461, %v1553
        %v1575 = vcombine.high %v1461, %v1553
        %v1577 = vunpack.c.l.s4 1983009808
        %v1578 = vunpack.c.0.s8 %v1577
        %v1579 = vlaneseq
        %v1580 = vshrl.u32 %v1579, 7
        %v1581 = vsub.s32 %v1578, %v1580
        %v1582 = vrot.slane %v1574, %v1581
        %v1584 = vunpack.c.l.s4 1983009808
        %v1585 = vunpack.c.0.s8 %v1584
        %v1586 = vlaneseq
        %v1587 = vshrl.u32 %v1586, 7
        %v1588 = vsub.s32 %v1585, %v1587
        %v1589 = vrot.slane %v1575, %v1588
        %v1590 = vcombine.low %v1566, %v1582
        %v1591 = vcombine.high %v1566, %v1582
        %v1593 = vunpack.c.l.s4 1934713408
        %v1594 = vunpack.c.0.s8 %v1593
        %v1595 = vlaneseq
        %v1596 = vshrl.u32 %v1595, 7
        %v1597 = vsub.s32 %v1594, %v1596
        %v1598 = vrot.slane %v1590, %v1597
        %v1600 = vunpack.c.l.s4 1934713408
        %v1601 = vunpack.c.0.s8 %v1600
        %v1602 = vlaneseq
        %v1603 = vshrl.u32 %v1602, 7
        %v1604 = vsub.s32 %v1601, %v1603
        %v1605 = vrot.slane %v1591, %v1604
        %v1606 = vcombine.low %v1573, %v1589
        %v1607 = vcombine.high %v1573, %v1589
        %v1609 = vunpack.c.l.s4 1934713408
        %v1610 = vunpack.c.0.s8 %v1609
        %v1611 = vlaneseq
        %v1612 = vshrl.u32 %v1611, 7
        %v1613 = vsub.s32 %v1610, %v1612
        %v1614 = vrot.slane %v1606, %v1613
        %v1616 = vunpack.c.l.s4 1934713408
        %v1617 = vunpack.c.0.s8 %v1616
        %v1618 = vlaneseq
        %v1619 = vshrl.u32 %v1618, 7
        %v1620 = vsub.s32 %v1617, %v1619
        %v1621 = vrot.slane %v1607, %v1620
        %v1622 = vcombine.high %v1598, 0.0
        %v1623 = vcombine.high %v1605, 0.0
        %v1624 = vcombine.high %v1614, 0.0
        %v1625 = vcombine.high %v1621, 0.0
        %v1626 = vcombine.low %v1598, %v1605
        %v1628 = vunpack.c.l.s4 1983009808
        %v1629 = vunpack.c.0.s8 %v1628
        %v1630 = vlaneseq
        %v1631 = vshrl.u32 %v1630, 7
        %v1632 = vsub.s32 %v1629, %v1631
        %v1633 = vrot.slane %v1626, %v1632
        %v1634 = vcombine.low %v1622, %v1623
        %v1636 = vunpack.c.l.s4 1983009808
        %v1637 = vunpack.c.0.s8 %v1636
        %v1638 = vlaneseq
        %v1639 = vshrl.u32 %v1638, 7
        %v1640 = vsub.s32 %v1637, %v1639
        %v1641 = vrot.slane %v1634, %v1640
        %v1642 = vcombine.low %v1614, %v1621
        %v1644 = vunpack.c.l.s4 1983009808
        %v1645 = vunpack.c.0.s8 %v1644
        %v1646 = vlaneseq
        %v1647 = vshrl.u32 %v1646, 7
        %v1648 = vsub.s32 %v1645, %v1647
        %v1649 = vrot.slane %v1642, %v1648
        %v1650 = vcombine.low %v1624, %v1625
        %v1652 = vunpack.c.l.s4 1983009808
        %v1653 = vunpack.c.0.s8 %v1652
        %v1654 = vlaneseq
        %v1655 = vshrl.u32 %v1654, 7
        %v1656 = vsub.s32 %v1653, %v1655
        %v1657 = vrot.slane %v1650, %v1656
        %v1658 = vcombine.low %v1633, %v1641
        %v1659 = vcombine.high %v1633, %v1641
        %v1661 = vunpack.c.l.s4 1934713408
        %v1662 = vunpack.c.0.s8 %v1661
        %v1663 = vlaneseq
        %v1664 = vshrl.u32 %v1663, 7
        %v1665 = vsub.s32 %v1662, %v1664
        %v1666 = vrot.slane %v1658, %v1665
        %v1668 = vunpack.c.l.s4 1934713408
        %v1669 = vunpack.c.0.s8 %v1668
        %v1670 = vlaneseq
        %v1671 = vshrl.u32 %v1670, 7
        %v1672 = vsub.s32 %v1669, %v1671
        %v1673 = vrot.slane %v1659, %v1672
        %v1674 = vcombine.low %v1649, %v1657
        %v1675 = vcombine.high %v1649, %v1657
        %v1677 = vunpack.c.l.s4 1934713408
        %v1678 = vunpack.c.0.s8 %v1677
        %v1679 = vlaneseq
        %v1680 = vshrl.u32 %v1679, 7
        %v1681 = vsub.s32 %v1678, %v1680
        %v1682 = vrot.slane %v1674, %v1681
        %v1684 = vunpack.c.l.s4 1934713408
        %v1685 = vunpack.c.0.s8 %v1684
        %v1686 = vlaneseq
        %v1687 = vshrl.u32 %v1686, 7
        %v1688 = vsub.s32 %v1685, %v1687
        %v1689 = vrot.slane %v1675, %v1688
        %v1690 = vcombine.low %v1666, %v1682
        %v1691 = vcombine.high %v1666, %v1682
        %v1692 = vcombine.low %v1673, %v1689
        %v1693 = vcombine.high %v1673, %v1689
        %1695 = vrot.lane.b32.xlu0 %v1691, 8
        %v1696 = vpop.permute.xlu0 %1695
        %1699 = vrot.lane.b32.xlu0 %v1692, 16
        %v1700 = vpop.permute.xlu0 %1699
        %1703 = vrot.lane.b32.xlu0 %v1693, 24
        %v1704 = vpop.permute.xlu0 %1703
        %v1706 = vsel %vm1129, %v1690, %v1696
        %vm1707 = vcmask 130048
        %v1708 = vsel %vm1707, %v1706, %v1700
        %vm1709 = vcmask 195584
        %v1710 = vsel %vm1709, %v1708, %v1704
        %v1711 = vpack.c.bf16 %v1710, %v1710
        %v1712 = vld [vmem:[%s5] sm:$0xf]
        %v1713 = vld [vmem:[%s5 + $0x4] sm:$0xf]
        %v1714 = vld [vmem:[%s5 + $0x8] sm:$0xf]
        %v1715 = vld [vmem:[%s5 + $0xc] sm:$0xf]
        %v1716 = vld [vmem:[%s6] sm:$0x1]
        %v1718 = vlaneseq
        %v1719 = vshrl.u32 %v1718, 7
        %v1720 = vsub.s32 0, %v1719
        %v1721 = vrot.slane %v1716, %v1720
        %v1727 = vunpack.c.l.b16 %v1712
        %v1728 = vunpack.c.l.b16 %v1713
        %v1729 = vunpack.c.l.b16 %v1714
        %v1730 = vunpack.c.l.b16 %v1715
        %v1731 = vpack.c.b16 %v1728, %v1727
        %v1732 = vpack.c.b16 %v1730, %v1729
        %v1736 = vsel %vm512, %v1711, 0
        %1738 = vmatprep.subr.bf16.mxu0 0
        %1739 = vmatpush1.bf16.msra.mxu0 %v1731
        %1740 = vmatprep.subr.bf16.mxu0 0
        %1741 = vmatpush1.bf16.msra.mxu0 %v1732
        %1742 = vmatprep.subr.bf16.mxu0 0
        %1743 = vmatpush1.bf16.msra.mxu0 0
        %1744 = vmatprep.subr.bf16.mxu0 0
        %1745 = vmatpush1.bf16.msra.mxu0 0
        %1746 = vmatprep.subr.bf16.mxu0 0
        %1747 = vmatpush1.bf16.msra.mxu0 0
        %1748 = vmatprep.subr.bf16.mxu0 0
        %1749 = vmatpush1.bf16.msra.mxu0 0
        %1750 = vmatprep.subr.bf16.mxu0 0
        %1751 = vmatpush1.bf16.msra.mxu0 0
        %1752 = vmatprep.subr.bf16.mxu0 0
        %1753 = vmatpush1.bf16.msra.mxu0 0
        %1754 = vmatprep.subr.bf16.mxu0 0
        %1755 = vmatpush1.bf16.msra.mxu0 0
        %1756 = vmatprep.subr.bf16.mxu0 0
        %1757 = vmatpush1.bf16.msra.mxu0 0
        %1758 = vmatprep.subr.bf16.mxu0 0
        %1759 = vmatpush1.bf16.msra.mxu0 0
        %1760 = vmatprep.subr.bf16.mxu0 0
        %1761 = vmatpush1.bf16.msra.mxu0 0
        %1762 = vmatprep.subr.bf16.mxu0 0
        %1763 = vmatpush1.bf16.msra.mxu0 0
        %1764 = vmatprep.subr.bf16.mxu0 0
        %1765 = vmatpush1.bf16.msra.mxu0 0
        %1766 = vmatprep.subr.bf16.mxu0 0
        %1767 = vmatpush1.bf16.msra.mxu0 0
        %1768 = vmatprep.subr.bf16.mxu0 0
        %1769 = vmatpush1.bf16.msra.mxu0 0
        %1770 = vmatprep.mubr.bf16.mxu0 0
        %1771 = vmatmul.mubr.bf16.gmra.mrb[0].mxu0 %v1736
        %v1772 = vpop.f32.mrb[0].mxu0
        %v1773 = vadd.f32 %v1721, %v1772
        %v1774 = vpop.f32.mrb[0].mxu0
        %v1775 = vpop.f32.mrb[0].mxu0
        %v1776 = vpop.f32.mrb[0].mxu0
        %1777 = vdwg.mxu0
        %1778 = vst.msk [vmem:[%s496] sm:$0xff] %vm512, %v1773
        %v1779 = vadd.f32 %v509, %v1773
        %v1780 = vld [vmem:[%s7] sm:$0x1]
        %v1781 = vld [vmem:[%s8] sm:$0x1]
        %v1782 = vsel %vm512, %v1779, 0.0
        %1783 = vadd.xlane.f32.xlu0 %v1782
        %v1784 = vpop.xlane.xlu0 %1783
        %v1785 = vmul.f32 %v1784, %v516
        %v1786 = vsub.f32 %v1779, %v1785
        %v1787 = vmul.f32 %v1786, %v1786
        %v1788 = vsel %vm512, %v1787, 0.0
        %1789 = vadd.xlane.f32.xlu0 %v1788
        %v1790 = vpop.xlane.xlu0 %1789
        %v1791 = vmul.f32 %v1790, 0.032258064
        %v1792 = vrsqrt.pop %v1791
        %v1793 = vmul.f32 %v1791, %v1792
        %vm1794 = vcmp.eq.f32.partialorder %v1791, inf
        %v1795 = vsel %vm1794, %v1791, %v1793
        %vm1796 = vcmp.eq.f32.partialorder %v1791, 0.0
        %v1797 = vand.u32 %v1791, 2147483648
        %v1798 = vsel %vm1796, %v1797, %v1795
        %v1799 = vadd.f32 %v1798, 1e-05
        %v1800 = vrcp.pop %v1799
        %v1802 = vlaneseq
        %v1803 = vshrl.u32 %v1802, 7
        %v1804 = vsub.s32 0, %v1803
        %v1805 = vrot.slane %v1780, %v1804
        %v1807 = vmul.f32 %v1805, %v1786
        %v1808 = vmul.f32 %v1807, %v1800
        %v1810 = vlaneseq
        %v1811 = vshrl.u32 %v1810, 7
        %v1812 = vsub.s32 0, %v1811
        %v1813 = vrot.slane %v1781, %v1812
        %v1815 = vadd.f32 %v1808, %v1813
        %v1816 = vpack.c.bf16 %v1815, %v1815
        %v1817 = vld [vmem:[%s9] sm:$0xf]
        %v1818 = vld [vmem:[%s9 + $0x4] sm:$0xf]
        %v1819 = vld [vmem:[%s9 + $0x8] sm:$0xf]
        %v1820 = vld [vmem:[%s9 + $0xc] sm:$0xf]
        %v1821 = vld [vmem:[%s10] sm:$0x1]
        %v1823 = vlaneseq
        %v1824 = vshrl.u32 %v1823, 7
        %v1825 = vsub.s32 0, %v1824
        %v1826 = vrot.slane %v1821, %v1825
        %v1832 = vunpack.c.l.b16 %v1817
        %v1833 = vunpack.c.l.b16 %v1818
        %v1834 = vunpack.c.l.b16 %v1819
        %v1835 = vunpack.c.l.b16 %v1820
        %v1836 = vpack.c.b16 %v1833, %v1832
        %v1837 = vpack.c.b16 %v1835, %v1834
        %v1841 = vsel %vm512, %v1816, 0
        %1843 = vmatprep.subr.bf16.mxu0 0
        %1844 = vmatpush1.bf16.msra.mxu0 %v1836
        %1845 = vmatprep.subr.bf16.mxu0 0
        %1846 = vmatpush1.bf16.msra.mxu0 %v1837
        %1847 = vmatprep.subr.bf16.mxu0 0
        %1848 = vmatpush1.bf16.msra.mxu0 0
        %1849 = vmatprep.subr.bf16.mxu0 0
        %1850 = vmatpush1.bf16.msra.mxu0 0
        %1851 = vmatprep.subr.bf16.mxu0 0
        %1852 = vmatpush1.bf16.msra.mxu0 0
        %1853 = vmatprep.subr.bf16.mxu0 0
        %1854 = vmatpush1.bf16.msra.mxu0 0
        %1855 = vmatprep.subr.bf16.mxu0 0
        %1856 = vmatpush1.bf16.msra.mxu0 0
        %1857 = vmatprep.subr.bf16.mxu0 0
        %1858 = vmatpush1.bf16.msra.mxu0 0
        %1859 = vmatprep.subr.bf16.mxu0 0
        %1860 = vmatpush1.bf16.msra.mxu0 0
        %1861 = vmatprep.subr.bf16.mxu0 0
        %1862 = vmatpush1.bf16.msra.mxu0 0
        %1863 = vmatprep.subr.bf16.mxu0 0
        %1864 = vmatpush1.bf16.msra.mxu0 0
        %1865 = vmatprep.subr.bf16.mxu0 0
        %1866 = vmatpush1.bf16.msra.mxu0 0
        %1867 = vmatprep.subr.bf16.mxu0 0
        %1868 = vmatpush1.bf16.msra.mxu0 0
        %1869 = vmatprep.subr.bf16.mxu0 0
        %1870 = vmatpush1.bf16.msra.mxu0 0
        %1871 = vmatprep.subr.bf16.mxu0 0
        %1872 = vmatpush1.bf16.msra.mxu0 0
        %1873 = vmatprep.subr.bf16.mxu0 0
        %1874 = vmatpush1.bf16.msra.mxu0 0
        %1875 = vmatprep.mubr.bf16.mxu0 0
        %1876 = vmatmul.mubr.bf16.gmra.mrb[0].mxu0 %v1841
        %v1877 = vpop.f32.mrb[0].mxu0
        %v1878 = vadd.f32 %v1826, %v1877
        %v1879 = vpop.f32.mrb[0].mxu0
        %v1880 = vpop.f32.mrb[0].mxu0
        %v1881 = vpop.f32.mrb[0].mxu0
        %1882 = vdwg.mxu0
        %v1883 = vmul.f32 %v1878, 0.5
        %v1884 = vmul.f32 %v1878, %v1878
        %v1885 = vmul.f32 %v1878, %v1884
        %v1886 = vmul.f32 %v1885, 0.044715
        %v1887 = vadd.f32 %v1878, %v1886
        %v1888 = vmul.f32 %v1887, 0.7978846
        %v1889 = vtanh.pop %v1888
        %v1890 = vadd.f32 %v1889, 1.0
        %v1891 = vmul.f32 %v1883, %v1890
        %v1892 = vpack.c.bf16 %v1891, %v1891
        %v1893 = vld [vmem:[%s11] sm:$0xf]
        %v1894 = vld [vmem:[%s11 + $0x4] sm:$0xf]
        %v1895 = vld [vmem:[%s11 + $0x8] sm:$0xf]
        %v1896 = vld [vmem:[%s11 + $0xc] sm:$0xf]
        %v1897 = vld [vmem:[%s11 + $0x10] sm:$0xf]
        %v1898 = vld [vmem:[%s11 + $0x14] sm:$0xf]
        %v1899 = vld [vmem:[%s11 + $0x18] sm:$0xf]
        %v1900 = vld [vmem:[%s11 + $0x1c] sm:$0xf]
        %v1901 = vld [vmem:[%s11 + $0x20] sm:$0xf]
        %v1902 = vld [vmem:[%s11 + $0x24] sm:$0xf]
        %v1903 = vld [vmem:[%s11 + $0x28] sm:$0xf]
        %v1904 = vld [vmem:[%s11 + $0x2c] sm:$0xf]
        %v1905 = vld [vmem:[%s11 + $0x30] sm:$0xf]
        %v1906 = vld [vmem:[%s11 + $0x34] sm:$0xf]
        %v1907 = vld [vmem:[%s11 + $0x38] sm:$0xf]
        %v1908 = vld [vmem:[%s11 + $0x3c] sm:$0xf]
        %v1909 = vld [vmem:[%s12] sm:$0x1]
        %v1911 = vlaneseq
        %v1912 = vshrl.u32 %v1911, 7
        %v1913 = vsub.s32 0, %v1912
        %v1914 = vrot.slane %v1909, %v1913
        %v1932 = vunpack.c.l.b16 %v1893
        %v1933 = vunpack.c.l.b16 %v1894
        %v1934 = vunpack.c.l.b16 %v1895
        %v1935 = vunpack.c.l.b16 %v1896
        %v1936 = vunpack.c.l.b16 %v1897
        %v1937 = vunpack.c.l.b16 %v1898
        %v1938 = vunpack.c.l.b16 %v1899
        %v1939 = vunpack.c.l.b16 %v1900
        %v1940 = vunpack.c.l.b16 %v1901
        %v1941 = vunpack.c.l.b16 %v1902
        %v1942 = vunpack.c.l.b16 %v1903
        %v1943 = vunpack.c.l.b16 %v1904
        %v1944 = vunpack.c.l.b16 %v1905
        %v1945 = vunpack.c.l.b16 %v1906
        %v1946 = vunpack.c.l.b16 %v1907
        %v1947 = vunpack.c.l.b16 %v1908
        %v1948 = vpack.c.b16 %v1933, %v1932
        %v1949 = vpack.c.b16 %v1935, %v1934
        %v1950 = vpack.c.b16 %v1937, %v1936
        %v1951 = vpack.c.b16 %v1939, %v1938
        %v1952 = vpack.c.b16 %v1941, %v1940
        %v1953 = vpack.c.b16 %v1943, %v1942
        %v1954 = vpack.c.b16 %v1945, %v1944
        %v1955 = vpack.c.b16 %v1947, %v1946
        %1964 = vmatprep.subr.bf16.mxu0 0
        %1965 = vmatpush1.bf16.msra.mxu0 %v1948
        %1966 = vmatprep.subr.bf16.mxu0 0
        %1967 = vmatpush1.bf16.msra.mxu0 %v1949
        %1968 = vmatprep.subr.bf16.mxu0 0
        %1969 = vmatpush1.bf16.msra.mxu0 %v1950
        %1970 = vmatprep.subr.bf16.mxu0 0
        %1971 = vmatpush1.bf16.msra.mxu0 %v1951
        %1972 = vmatprep.subr.bf16.mxu0 0
        %1973 = vmatpush1.bf16.msra.mxu0 %v1952
        %1974 = vmatprep.subr.bf16.mxu0 0
        %1975 = vmatpush1.bf16.msra.mxu0 %v1953
        %1976 = vmatprep.subr.bf16.mxu0 0
        %1977 = vmatpush1.bf16.msra.mxu0 %v1954
        %1978 = vmatprep.subr.bf16.mxu0 0
        %1979 = vmatpush1.bf16.msra.mxu0 %v1955
        %1980 = vmatprep.subr.bf16.mxu0 0
        %1981 = vmatpush1.bf16.msra.mxu0 0
        %1982 = vmatprep.subr.bf16.mxu0 0
        %1983 = vmatpush1.bf16.msra.mxu0 0
        %1984 = vmatprep.subr.bf16.mxu0 0
        %1985 = vmatpush1.bf16.msra.mxu0 0
        %1986 = vmatprep.subr.bf16.mxu0 0
        %1987 = vmatpush1.bf16.msra.mxu0 0
        %1988 = vmatprep.subr.bf16.mxu0 0
        %1989 = vmatpush1.bf16.msra.mxu0 0
        %1990 = vmatprep.subr.bf16.mxu0 0
        %1991 = vmatpush1.bf16.msra.mxu0 0
        %1992 = vmatprep.subr.bf16.mxu0 0
        %1993 = vmatpush1.bf16.msra.mxu0 0
        %1994 = vmatprep.subr.bf16.mxu0 0
        %1995 = vmatpush1.bf16.msra.mxu0 0
        %1996 = vmatprep.mubr.bf16.mxu0 0
        %1997 = vmatmul.mubr.bf16.gmra.mrb[0].mxu0 %v1892
        %v1998 = vpop.f32.mrb[0].mxu0
        %v1999 = vadd.f32 %v1914, %v1998
        %v2000 = vpop.f32.mrb[0].mxu0
        %v2001 = vpop.f32.mrb[0].mxu0
        %v2002 = vpop.f32.mrb[0].mxu0
        %2003 = vdwg.mxu0
        %v2004 = vadd.f32 %v1779, %v1999
        %2005 = vst.msk [vmem:[%s489] sm:$0xff] %vm512, %v2004
        %s2006 = sand.u32 %s319, 1
        %s2007 = scalar_lea.sflag [#allocation3], %s2006
        %s2008 = sand.u32 %s319, 1
        %s2009 = smul.addr %s2008, 8
        %s2010 = scalar_lea.vmem [#allocation2], %s2009
        %s2011 = sand.u32 %s33, 1
        %s2012 = scalar_lea.sflag [#allocation5], %s2011
        %s2013 = sand.u32 %s345, 1
        %s2014 = smul.addr %s2013, 8
        %s2015 = scalar_lea.vmem [#allocation4], %s2014
        %s2016 = sand.u32 %s33, 1
        %s2017 = scalar_lea.sflag [#allocation5], %s2016
        %s2018 = sand.u32 %s371, 1
        %s2019 = smul.addr %s2018, 16
        %s2020 = scalar_lea.vmem [#allocation6], %s2019
        // Predicated region
        $region73: #{tpu_custom_call.1} parent=71 // pred_check
          %p2021 = pneg %p329
        $region74: #{tpu_custom_call.1} parent=71 // pred_check_branch
          %2023 = sbr.rel (%p2021) target = $region76
        $region75: #{tpu_custom_call.1} parent=71 // pred_region
          %s2025 = ssub.s32 128, 128
          %2026 = vsyncadd %s2007, %s2025
          %s2027 = smul.addr %s33, 128
          %s2028 = scalar_lea.hbm %s13, %s2027
          %s2030 = sshll.u32 %s2010, 4
          %s2031 = int_to_ptr.vmem [resolvable:$true] %s2030
          %2033 = dma.vmem_to_hbm [thread:$0]  %s2031, 128, %s2028, %s2007
        $region76: #{tpu_custom_call.1} parent=71 // pred_fallthru
          _
        // Predicated region
        $region77: #{tpu_custom_call.1} parent=71 // pred_check
          %p2034 = pneg %p355
        $region78: #{tpu_custom_call.1} parent=71 // pred_check_branch
          %2036 = sbr.rel (%p2034) target = $region80
        $region79: #{tpu_custom_call.1} parent=71 // pred_region
          %s2038 = ssub.s32 128, 128
          %2039 = vsyncadd %s2012, %s2038
          %s2040 = smul.addr %s33, 128
          %s2041 = scalar_lea.hbm %s14, %s2040
          %s2043 = sshll.u32 %s2015, 4
          %s2044 = int_to_ptr.vmem [resolvable:$true] %s2043
          %2046 = dma.vmem_to_hbm [thread:$0]  %s2044, 128, %s2041, %s2012
        $region80: #{tpu_custom_call.1} parent=71 // pred_fallthru
          _
        // Predicated region
        $region81: #{tpu_custom_call.1} parent=71 // pred_check
          %p2047 = pneg %p381
        $region82: #{tpu_custom_call.1} parent=71 // pred_check_branch
          %2049 = sbr.rel (%p2047) target = $region84
        $region83: #{tpu_custom_call.1} parent=71 // pred_region
          %s2051 = ssub.s32 256, 256
          %2052 = vsyncadd %s2017, %s2051
          %s2053 = smul.addr %s33, 4
          %s2054 = smul.addr %s2053, 64
          %s2055 = scalar_lea.hbm %s15, %s2054
          %s2056 = sshll.u32 %s2020, 4
          %s2057 = int_to_ptr.vmem [resolvable:$true] %s2056
          %2062 = dma.vmem_to_hbm [thread:$0]  %s2057, 256, %s2055, %s2017, 64, 64, 4
        $region84: #{tpu_custom_call.1} parent=71 // pred_fallthru
          _
      $region72: #{tpu_custom_call.1} parent=5 // pred_fallthru
        _
      %p2063 = scmp.le.s32.totalorder 2, %s28
      // Predicated region
      $region85: #{tpu_custom_call.1} parent=5 // pred_check
        %p2064 = pneg %p2063
      $region86: #{tpu_custom_call.1} parent=5 // pred_check_branch
        %2066 = sbr.rel (%p2064) target = $region88
      $region87: #{tpu_custom_call.1} parent=5 // pred_region
        %s2067 = ssub.s32 %s28, 2
        // Predicated region
        $region89: #{tpu_custom_call.1} parent=87 // pred_check
          %p2068 = pneg %p335
        $region90: #{tpu_custom_call.1} parent=87 // pred_check_branch
          %2070 = sbr.rel (%p2068) target = $region92
        $region91: #{tpu_custom_call.1} parent=87 // pred_region
          %s2071 = sand.u32 %s320, 1
          %s2072 = scalar_lea.sflag [#allocation3], %s2071
          %s2073 = sand.u32 %s320, 1
          %s2074 = smul.addr %s2073, 8
          %s2075 = scalar_lea.vmem [#allocation2], %s2074
          %2076 = dma.done %s2072, 128
        $region92: #{tpu_custom_call.1} parent=87 // pred_fallthru
          _
        // Predicated region
        $region93: #{tpu_custom_call.1} parent=87 // pred_check
          %p2077 = pneg %p361
        $region94: #{tpu_custom_call.1} parent=87 // pred_check_branch
          %2079 = sbr.rel (%p2077) target = $region96
        $region95: #{tpu_custom_call.1} parent=87 // pred_region
          %s2080 = sand.u32 %s34, 1
          %s2081 = scalar_lea.sflag [#allocation5], %s2080
          %s2082 = sand.u32 %s346, 1
          %s2083 = smul.addr %s2082, 8
          %s2084 = scalar_lea.vmem [#allocation4], %s2083
          %2085 = dma.done %s2081, 128
        $region96: #{tpu_custom_call.1} parent=87 // pred_fallthru
          _
        // Predicated region
        $region97: #{tpu_custom_call.1} parent=87 // pred_check
          %p2086 = pneg %p387
        $region98: #{tpu_custom_call.1} parent=87 // pred_check_branch
          %2088 = sbr.rel (%p2086) target = $region100
        $region99: #{tpu_custom_call.1} parent=87 // pred_region
          %s2089 = sand.u32 %s34, 1
          %s2090 = scalar_lea.sflag [#allocation5], %s2089
          %s2091 = sand.u32 %s372, 1
          %s2092 = smul.addr %s2091, 16
          %s2093 = scalar_lea.vmem [#allocation6], %s2092
          %2094 = dma.done %s2090, 256
        $region100: #{tpu_custom_call.1} parent=87 // pred_fallthru
          _
      $region88: #{tpu_custom_call.1} parent=5 // pred_fallthru
        _
    $region6: #{tpu_custom_call.1} parent=1 // loop_footer
      %s32 = sadd.s32 1, %s28
    $region7: #{tpu_custom_call.1} parent=1 // loop_footer_branch
      %27 = sbr.rel target = $region3
    $region8: #{tpu_custom_call.1} parent=1 // loop_exit
      _
    %2095 = vsyncpa [#allocation3], 1
    %s2096 = scalar_lea.sflag [#allocation3], 1
    %2097 = vsyncpa %s2096, 1
    %2098 = vsyncpa [#allocation5], 1
    %s2099 = scalar_lea.sflag [#allocation5], 1
    %2100 = vsyncpa %s2099, 1

</llo_original>
